<compile_context>
chip_gen: v5e
topology: v5e:2x2
jax: 0.10.0
libtpu: 0.0.40
codegen_flags: <defaults>
</compile_context>

<pallas_src>
import functools

import jax
import jax.numpy as jnp
from jax import lax
from jax.experimental import pallas as pl
from jax.experimental.pallas import tpu as pltpu

_NEG_MASK = -1e30  # baked into the padded codebook columns of the noise tensor


def _round_up(x, m):
    return ((x + m - 1) // m) * m


def _vmem_capacity_bytes():
    try:
        return int(pltpu.get_tpu_info().vmem_capacity_bytes)
    except Exception:
        return 64 * 1024 * 1024  # conservative: v7x per-core physical VMEM


def _default_block_rows(dim_p, ne_p, aux_out, vmem_cap):
    # Resident codebook: two bf16 orientations; assume they may still be
    # double-buffered if Buffered(1) is unsupported by this build.
    resident = 2 * (2 * ne_p * dim_p) * 2
    per_row = (2 * 4 * dim_p      # x tile, f32, double-buffered
               + 2 * 4 * dim_p    # output slab, f32, double-buffered
               + 2 * 2 * ne_p     # gumbel tile, bf16, double-buffered
               + 16 * ne_p        # ~4 live f32 (tn, ne_p) temporaries (y, e, iota, cmp)
               + 12 * dim_p)      # ~3 live f32 (tn, dim_p) temporaries
    if aux_out:
        per_row += 2 * 4 * 128
    budget = int(0.6 * vmem_cap) - resident
    tn = budget // max(per_row, 1)
    return int(max(8, min(2048, (tn // 8) * 8)))


def _spb_compute(x, wt_dist, w_out, g, *, matmul_dtype):
    """Per-tile math.

    x:(tn,dim_p) f32, wt_dist:(dim_p,ne_p) matmul_dtype (pre-scaled by 1/tau),
    w_out:(ne_p,dim_p) matmul_dtype (unscaled), g:(tn,ne_p) f32 (pre-scaled by
    1/tau; padded codebook columns already hold -1e30).
    """
    tn, ne_p = g.shape
    # Scaled logits: (x @ W.T) / tau + g / tau  (tau folded into wt_dist / g).
    y = jnp.dot(x.astype(matmul_dtype), wt_dist,
                preferred_element_type=jnp.float32) + g                  # (tn, ne_p)
    row_max = jnp.max(y, axis=1, keepdims=True)
    e = jnp.exp(y - row_max)                                             # unnormalized
    denom = jnp.sum(e, axis=1, keepdims=True)
    # Normalize AFTER the second matmul (narrow (tn, dim_p) scale, not (tn, ne_p)).
    out_un = jnp.dot(e.astype(matmul_dtype), w_out,
                     preferred_element_type=jnp.float32)                 # (tn, dim_p)
    out = out_un * pl.reciprocal(denom, approx=True)                     # EUP slot

    # argmax in logit space (softmax monotone); first occurrence, like torch.
    col = lax.broadcasted_iota(jnp.int32, (tn, ne_p), 1)
    ind_f = jnp.min(jnp.where(y == row_max, col, ne_p), axis=1,
                    keepdims=True).astype(jnp.float32)                   # (tn, 1)
    # per-row L1 partial; padded lanes of out/x are exactly zero.
    row_l1 = jnp.sum(jnp.abs(out - x), axis=1, keepdims=True)            # (tn, 1)
    return out, ind_f, row_l1


def _spb_kernel_packed(x_ref, wt_ref, w_ref, g_ref, out_ref, *, dim, matmul_dtype):
    out, ind_f, row_l1 = _spb_compute(
        x_ref[...], wt_ref[...], w_ref[...], g_ref[...].astype(jnp.float32),
        matmul_dtype=matmul_dtype)
    tn, dim_p = out.shape
    lane = lax.broadcasted_iota(jnp.int32, (tn, dim_p), 1)
    slab = jnp.where(lane == dim, ind_f, out)
    slab = jnp.where(lane == dim + 1, row_l1, slab)
    out_ref[...] = slab.astype(out_ref.dtype)


def _spb_kernel_aux(x_ref, wt_ref, w_ref, g_ref, out_ref, aux_ref, *, matmul_dtype):
    out, ind_f, row_l1 = _spb_compute(
        x_ref[...], wt_ref[...], w_ref[...], g_ref[...].astype(jnp.float32),
        matmul_dtype=matmul_dtype)
    out_ref[...] = out.astype(out_ref.dtype)
    tn = out.shape[0]
    lane = lax.broadcasted_iota(jnp.int32, (tn, 128), 1)
    aux = jnp.where(lane == 0, ind_f, jnp.where(lane == 1, row_l1, 0.0))
    aux_ref[...] = aux.astype(aux_ref.dtype)


def spb_forward(x, embed_weight, *, temp=0.9, key=None, gumbel=None,
                block_rows=None, matmul_dtype=jnp.bfloat16,
                noise_dtype=jnp.bfloat16):
    """Mirrors SPB.forward: returns (output, loss, embed_ind).

    If `gumbel` (shape (N, n_embed), f32) is given it is used as the Gumbel
    noise (deterministic, testable path); otherwise it is generated from `key`
    wrapper-side.  Set matmul_dtype / noise_dtype to float32 for a full-f32 run.
    """
    n_embed, dim = embed_weight.shape
    flatten = x.reshape(-1, dim).astype(jnp.float32)
    n = flatten.shape[0]
    inv_tau = 1.0 / float(temp)

    dim_p = _round_up(dim, 128)
    ne_p = _round_up(n_embed, 128)
    pack_in_slab = (dim_p - dim) >= 2   # spare lanes available for ind / L1

    vmem_cap = _vmem_capacity_bytes()
    if block_rows is None:
        block_rows = _default_block_rows(dim_p, ne_p, not pack_in_slab, vmem_cap)
    tn = max(8, _round_up(int(block_rows), 8))
    if n > 8:
        # keep >= 2 grid steps so "parallel" megacore sharding uses both cores.
        tn = min(tn, _round_up(-(-n // 2), 8))
    n_blocks = -(-n // tn)
    n_pad = n_blocks * tn

    x_pad = jnp.pad(flatten, ((0, n_pad - n), (0, dim_p - dim)))
    w_f32 = embed_weight.astype(jnp.float32)
    # dist-orientation copy: pre-transposed, pre-scaled by 1/tau, matmul dtype.
    wt_dist = jnp.pad((w_f32 * inv_tau).T,
                      ((0, dim_p - dim), (0, ne_p - n_embed))).astype(matmul_dtype)
    # output-orientation copy: unscaled.
    w_out = jnp.pad(w_f32, ((0, ne_p - n_embed), (0, dim_p - dim))).astype(matmul_dtype)

    if gumbel is None:
        if key is None:
            key = jax.random.PRNGKey(0)
        gumbel = jax.random.gumbel(key, (n, n_embed), dtype=jnp.float32)
    g_scaled = gumbel.astype(jnp.float32) * inv_tau
    g_pad = jnp.pad(g_scaled, ((0, n_pad - n), (0, ne_p - n_embed)),
                    constant_values=((0.0, 0.0), (0.0, _NEG_MASK)))
    g_pad = g_pad.astype(noise_dtype)

    cost = pl.CostEstimate(
        flops=4 * n_pad * ne_p * dim_p,
        transcendentals=n_pad * ne_p,
        bytes_accessed=int(4 * x_pad.size
                           + g_pad.size * g_pad.dtype.itemsize
                           + wt_dist.size * wt_dist.dtype.itemsize
                           + w_out.size * w_out.dtype.itemsize
                           + 4 * n_pad * dim_p
                           + (0 if pack_in_slab else 4 * n_pad * 128)))
    cparams = pltpu.CompilerParams(
        dimension_semantics=("parallel",),
        vmem_limit_bytes=int(0.75 * vmem_cap))

    if pack_in_slab:
        kernel = functools.partial(_spb_kernel_packed, dim=dim,
                                   matmul_dtype=matmul_dtype)
        out_shape = jax.ShapeDtypeStruct((n_pad, dim_p), jnp.float32)
    else:
        kernel = functools.partial(_spb_kernel_aux, matmul_dtype=matmul_dtype)
        out_shape = (jax.ShapeDtypeStruct((n_pad, dim_p), jnp.float32),
                     jax.ShapeDtypeStruct((n_pad, 128), jnp.float32))

    def _call(weight_pipeline_mode):
        wkw = ({} if weight_pipeline_mode is None
               else {"pipeline_mode": weight_pipeline_mode})
        in_specs = [
            pl.BlockSpec((tn, dim_p), lambda i: (i, 0)),
            pl.BlockSpec((dim_p, ne_p), lambda i: (0, 0), **wkw),   # resident W.T/tau
            pl.BlockSpec((ne_p, dim_p), lambda i: (0, 0), **wkw),   # resident W
            pl.BlockSpec((tn, ne_p), lambda i: (i, 0)),
        ]
        if pack_in_slab:
            out_specs = pl.BlockSpec((tn, dim_p), lambda i: (i, 0))
        else:
            out_specs = (pl.BlockSpec((tn, dim_p), lambda i: (i, 0)),
                         pl.BlockSpec((tn, 128), lambda i: (i, 0)))
        grid_spec = pltpu.PrefetchScalarGridSpec(
            num_scalar_prefetch=0, grid=(n_blocks,),
            in_specs=in_specs, out_specs=out_specs)
        return pl.pallas_call(kernel, grid_spec=grid_spec, out_shape=out_shape,
                              compiler_params=cparams, cost_estimate=cost)(
                                  x_pad, wt_dist, w_out, g_pad)

    try:
        # Constant index_map -> single-buffered resident codebook copies.
        res = _call(pl.Buffered(1))
    except Exception:
        # Fallback for builds that reject Buffered(1) (costs one extra buffer).
        res = _call(None)

    if pack_in_slab:
        slab = res
        output = slab[:n, :dim]
        embed_ind = slab[:n, dim].astype(jnp.int32)
        l1_rows = slab[:n, dim + 1]
    else:
        out_full, aux = res
        output = out_full[:n, :dim]
        embed_ind = aux[:n, 0].astype(jnp.int32)
        l1_rows = aux[:n, 1]
    loss = jnp.sum(l1_rows) / (n * dim)
    return output, loss, embed_ind


if __name__ == "__main__":
    root = jax.random.PRNGKey(0)
    k_w, k_x, k_g, k_w2, k_x2, k_s2 = jax.random.split(root, 6)
    temp = 0.9
    inv_tau = 1.0 / temp

    # ---- case 1: dim=32, n_embed=64; packed-slab path; external Gumbel noise ----
    dim, n_embed = 32, 64
    embed_weight = jax.random.normal(k_w, (n_embed, dim), dtype=jnp.float32)  # N(0,1) init
    x = jax.random.normal(k_x, (3, 100, dim), dtype=jnp.float32)              # N = 300 rows
    n = 300
    flatten = x.reshape(-1, dim)
    gumbel = jax.random.gumbel(k_g, (n, n_embed), dtype=jnp.float32)

    out, loss, ind = spb_forward(x, embed_weight, temp=temp, gumbel=gumbel,
                                 block_rows=128)      # 3 row tiles, ragged tail
    jax.block_until_ready((out, loss, ind))

    # reference mirroring the kernel's bf16 pipeline
    bw = embed_weight.astype(jnp.bfloat16)
    wtd = (embed_weight * inv_tau).T.astype(jnp.bfloat16)
    g_used = (gumbel * inv_tau).astype(jnp.bfloat16).astype(jnp.float32)
    y = jnp.dot(flatten.astype(jnp.bfloat16), wtd,
                preferred_element_type=jnp.float32) + g_used
    soft = jax.nn.softmax(y, axis=1)
    ref_out = jnp.dot(soft.astype(jnp.bfloat16), bw, preferred_element_type=jnp.float32)
    ref_loss = jnp.mean(jnp.abs(ref_out - flatten))
    ref_ind = jnp.argmax(y, axis=1)

    assert out.shape == (n, dim) and ind.shape == (n,) and loss.shape == ()
    assert jnp.allclose(out, ref_out, atol=3e-2, rtol=2e-2), \
        float(jnp.max(jnp.abs(out - ref_out)))
    assert jnp.allclose(loss, ref_loss, atol=1e-2, rtol=2e-2), \
        (float(loss), float(ref_loss))
    assert float(jnp.mean((ind == ref_ind).astype(jnp.float32))) >= 0.97
    assert bool(jnp.all((ind >= 0) & (ind < n_embed)))
    # loss must equal mean |output - flatten| recomputed from the kernel's own output
    assert jnp.allclose(loss, jnp.mean(jnp.abs(out - flatten)), atol=1e-5, rtol=1e-4)

    # ---- full-f32 escape hatch vs the PyTorch-faithful f32 reference ----
    out32, loss32, ind32 = spb_forward(x, embed_weight, temp=temp, gumbel=gumbel,
                                       matmul_dtype=jnp.float32,
                                       noise_dtype=jnp.float32)
    jax.block_until_ready((out32, loss32, ind32))
    y32 = (flatten @ embed_weight.T + gumbel) * inv_tau
    soft32 = jax.nn.softmax(y32, axis=1)
    ref_out32 = soft32 @ embed_weight
    ref_loss32 = jnp.mean(jnp.abs(ref_out32 - flatten))
    ref_ind32 = jnp.argmax(y32, axis=1)
    assert jnp.allclose(out32, ref_out32, atol=1.5e-2, rtol=1e-2)
    assert jnp.allclose(loss32, ref_loss32, atol=2e-3, rtol=1e-2)
    assert float(jnp.mean((ind32 == ref_ind32).astype(jnp.float32))) >= 0.98

    # ---- case 2: dim=128 (no spare lanes -> aux output path), noise from key ----
    dim2, n_embed2 = 128, 48
    embed_weight2 = jax.random.normal(k_w2, (n_embed2, dim2), dtype=jnp.float32)
    x2 = jax.random.normal(k_x2, (2, 72, dim2), dtype=jnp.float32)   # N = 144 rows
    n2 = 2 * 72
    flatten2 = x2.reshape(-1, dim2)

    out2, loss2, ind2 = spb_forward(x2, embed_weight2, temp=temp, key=k_s2)
    jax.block_until_ready((out2, loss2, ind2))

    gumbel2 = jax.random.gumbel(k_s2, (n2, n_embed2), dtype=jnp.float32)
    bw2 = embed_weight2.astype(jnp.bfloat16)
    wtd2 = (embed_weight2 * inv_tau).T.astype(jnp.bfloat16)
    g2_used = (gumbel2 * inv_tau).astype(jnp.bfloat16).astype(jnp.float32)
    y2 = jnp.dot(flatten2.astype(jnp.bfloat16), wtd2,
                 preferred_element_type=jnp.float32) + g2_used
    soft2 = jax.nn.softmax(y2, axis=1)
    ref_out2 = jnp.dot(soft2.astype(jnp.bfloat16), bw2, preferred_element_type=jnp.float32)
    ref_ind2 = jnp.argmax(y2, axis=1)

    assert out2.shape == (n2, dim2) and ind2.shape == (n2,)
    assert bool(jnp.all((ind2 >= 0) & (ind2 < n_embed2)))
    assert bool(jnp.isfinite(loss2))
    assert jnp.allclose(out2, ref_out2, atol=3e-2, rtol=2e-2)
    assert float(jnp.mean((ind2 == ref_ind2).astype(jnp.float32))) >= 0.97
    assert jnp.allclose(loss2, jnp.mean(jnp.abs(out2 - flatten2)), atol=1e-5, rtol=1e-4)

    print("KERNEL_OK")
</pallas_src>

<mosaic_0001>
module attributes {stable_mosaic.version = 11 : i64} {
  func.func @_spb_kernel_packed(%arg0: i32, %arg1: memref<128x128xf32, #tpu.memory_space<vmem>>, %arg2: memref<128x128xbf16, #tpu.memory_space<vmem>>, %arg3: memref<128x128xbf16, #tpu.memory_space<vmem>>, %arg4: memref<128x128xbf16, #tpu.memory_space<vmem>>, %arg5: memref<128x128xf32, #tpu.memory_space<vmem>>) attributes {dimension_semantics = [#tpu.dimension_semantics<parallel>], iteration_bounds = array<i64: 3>, scalar_prefetch = 0 : i64, scratch_operands = 0 : i64, tpu.core_type = #tpu.core_type<tc>, window_params = [{transform_indices = @transform_0, window_bounds = array<i64: 128, 128>}, {pipeline_mode = #tpu.pipeline_mode<synchronous>, transform_indices = @transform_1, window_bounds = array<i64: 128, 128>}, {pipeline_mode = #tpu.pipeline_mode<synchronous>, transform_indices = @transform_2, window_bounds = array<i64: 128, 128>}, {transform_indices = @transform_3, window_bounds = array<i64: 128, 128>}, {transform_indices = @transform_4, window_bounds = array<i64: 128, 128>}]} {
    %c0 = arith.constant 0 : index
    %c0_0 = arith.constant 0 : index
    %0 = vector.load %arg1[%c0, %c0_0] : memref<128x128xf32, #tpu.memory_space<vmem>>, vector<128x128xf32>
    %c0_1 = arith.constant 0 : index
    %c0_2 = arith.constant 0 : index
    %1 = vector.load %arg2[%c0_1, %c0_2] : memref<128x128xbf16, #tpu.memory_space<vmem>>, vector<128x128xbf16>
    %c0_3 = arith.constant 0 : index
    %c0_4 = arith.constant 0 : index
    %2 = vector.load %arg3[%c0_3, %c0_4] : memref<128x128xbf16, #tpu.memory_space<vmem>>, vector<128x128xbf16>
    %c0_5 = arith.constant 0 : index
    %c0_6 = arith.constant 0 : index
    %3 = vector.load %arg4[%c0_5, %c0_6] : memref<128x128xbf16, #tpu.memory_space<vmem>>, vector<128x128xbf16>
    %4 = arith.extf %3 : vector<128x128xbf16> to vector<128x128xf32>
    %5 = arith.truncf %0 : vector<128x128xf32> to vector<128x128xbf16>
    %cst = arith.constant dense<0.000000e+00> : vector<128x128xf32>
    %6 = tpu.matmul %5, %1, %cst {dimension_numbers = #tpu.dot_dimension_numbers<[1], [0], [0], [1], [0, 0, 1, 1], [], []>} : vector<128x128xbf16>, vector<128x128xbf16>, vector<128x128xf32> -> vector<128x128xf32>
    %7 = arith.addf %6, %4 : vector<128x128xf32>
    %cst_7 = arith.constant dense<0xFF800000> : vector<128xf32>
    %8 = vector.multi_reduction <maximumf>, %7, %cst_7 [1] : vector<128x128xf32> to vector<128xf32>
    %9 = vector.shape_cast %8 : vector<128xf32> to vector<128x1xf32>
    %10 = vector.broadcast %9 : vector<128x1xf32> to vector<128x128xf32>
    %11 = arith.subf %7, %10 : vector<128x128xf32>
    %12 = math.exp %11 : vector<128x128xf32>
    %cst_8 = arith.constant dense<0.000000e+00> : vector<128xf32>
    %13 = vector.multi_reduction <add>, %12, %cst_8 [1] : vector<128x128xf32> to vector<128xf32>
    %14 = vector.shape_cast %13 : vector<128xf32> to vector<128x1xf32>
    %15 = arith.truncf %12 : vector<128x128xf32> to vector<128x128xbf16>
    %cst_9 = arith.constant dense<0.000000e+00> : vector<128x128xf32>
    %16 = tpu.matmul %15, %2, %cst_9 {dimension_numbers = #tpu.dot_dimension_numbers<[1], [0], [0], [1], [0, 0, 1, 1], [], []>} : vector<128x128xbf16>, vector<128x128xbf16>, vector<128x128xf32> -> vector<128x128xf32>
    %17 = tpu.reciprocal %14 {approx = true} : vector<128x1xf32> -> vector<128x1xf32>
    %18 = vector.broadcast %17 : vector<128x1xf32> to vector<128x128xf32>
    %19 = arith.mulf %16, %18 : vector<128x128xf32>
    %20 = tpu.iota {dimensions = array<i32: 1>} : vector<128x128xi32>
    %21 = vector.broadcast %9 : vector<128x1xf32> to vector<128x128xf32>
    %22 = arith.cmpf oeq, %7, %21 : vector<128x128xf32>
    %c128_i32 = arith.constant 128 : i32
    %23 = vector.broadcast %c128_i32 : i32 to vector<128x128xi32>
    %24 = arith.select %22, %20, %23 : vector<128x128xi1>, vector<128x128xi32>
    %cst_10 = arith.constant dense<2147483647> : vector<128xi32>
    %25 = vector.multi_reduction <minsi>, %24, %cst_10 [1] : vector<128x128xi32> to vector<128xi32>
    %26 = vector.shape_cast %25 : vector<128xi32> to vector<128x1xi32>
    %27 = arith.sitofp %26 : vector<128x1xi32> to vector<128x1xf32>
    %28 = arith.subf %19, %0 : vector<128x128xf32>
    %29 = math.absf %28 : vector<128x128xf32>
    %cst_11 = arith.constant dense<0.000000e+00> : vector<128xf32>
    %30 = vector.multi_reduction <add>, %29, %cst_11 [1] : vector<128x128xf32> to vector<128xf32>
    %31 = vector.shape_cast %30 : vector<128xf32> to vector<128x1xf32>
    %32 = tpu.iota {dimensions = array<i32: 1>} : vector<128x128xi32>
    %c32_i32 = arith.constant 32 : i32
    %33 = vector.broadcast %c32_i32 : i32 to vector<128x128xi32>
    %34 = arith.cmpi eq, %32, %33 : vector<128x128xi32>
    %35 = vector.shape_cast %27 : vector<128x1xf32> to vector<128x1xf32>
    %36 = vector.broadcast %35 : vector<128x1xf32> to vector<128x128xf32>
    %37 = arith.select %34, %36, %19 : vector<128x128xi1>, vector<128x128xf32>
    %c33_i32 = arith.constant 33 : i32
    %38 = vector.broadcast %c33_i32 : i32 to vector<128x128xi32>
    %39 = arith.cmpi eq, %32, %38 : vector<128x128xi32>
    %40 = vector.shape_cast %31 : vector<128x1xf32> to vector<128x1xf32>
    %41 = vector.broadcast %40 : vector<128x1xf32> to vector<128x128xf32>
    %42 = arith.select %39, %41, %37 : vector<128x128xi1>, vector<128x128xf32>
    %c0_12 = arith.constant 0 : index
    %c0_13 = arith.constant 0 : index
    %43 = vector.load %arg5[%c0_12, %c0_13] : memref<128x128xf32, #tpu.memory_space<vmem>>, vector<128x128xf32>
    tpu.vector_store %arg5[%c0_12, %c0_13], %42 {strides = array<i32>} : memref<128x128xf32, #tpu.memory_space<vmem>>, vector<128x128xf32>,
    return
  }
  func.func @transform_0(%arg0: i32) -> (i32, i32) {
    %c0_i32 = arith.constant 0 : i32
    %c0_i32_0 = arith.constant 0 : i32
    return %arg0, %c0_i32 : i32, i32
  }
  func.func @transform_1(%arg0: i32) -> (i32, i32) {
    %c0_i32 = arith.constant 0 : i32
    %c0_i32_0 = arith.constant 0 : i32
    %c0_i32_1 = arith.constant 0 : i32
    return %c0_i32, %c0_i32_0 : i32, i32
  }
  func.func @transform_2(%arg0: i32) -> (i32, i32) {
    %c0_i32 = arith.constant 0 : i32
    %c0_i32_0 = arith.constant 0 : i32
    %c0_i32_1 = arith.constant 0 : i32
    return %c0_i32, %c0_i32_0 : i32, i32
  }
  func.func @transform_3(%arg0: i32) -> (i32, i32) {
    %c0_i32 = arith.constant 0 : i32
    %c0_i32_0 = arith.constant 0 : i32
    return %arg0, %c0_i32 : i32, i32
  }
  func.func @transform_4(%arg0: i32) -> (i32, i32) {
    %c0_i32 = arith.constant 0 : i32
    %c0_i32_0 = arith.constant 0 : i32
    return %arg0, %c0_i32 : i32, i32
  }
}

module attributes {stable_mosaic.version = 11 : i64} {
  func.func @_spb_kernel_packed(%arg0: i32, %arg1: memref<128x128xf32, #tpu.memory_space<vmem>>, %arg2: memref<128x128xbf16, #tpu.memory_space<vmem>>, %arg3: memref<128x128xbf16, #tpu.memory_space<vmem>>, %arg4: memref<128x128xbf16, #tpu.memory_space<vmem>>, %arg5: memref<128x128xf32, #tpu.memory_space<vmem>>) attributes {dimension_semantics = [#tpu.dimension_semantics<parallel>], iteration_bounds = array<i64: 3>, scalar_prefetch = 0 : i64, scratch_operands = 0 : i64, tpu.core_type = #tpu.core_type<tc>, window_params = [{transform_indices = @transform_0, window_bounds = array<i64: 128, 128>}, {pipeline_mode = #tpu.pipeline_mode<synchronous>, transform_indices = @transform_1, window_bounds = array<i64: 128, 128>}, {pipeline_mode = #tpu.pipeline_mode<synchronous>, transform_indices = @transform_2, window_bounds = array<i64: 128, 128>}, {transform_indices = @transform_3, window_bounds = array<i64: 128, 128>}, {transform_indices = @transform_4, window_bounds = array<i64: 128, 128>}]} {
    %c0 = arith.constant 0 : index
    %c0_0 = arith.constant 0 : index
    %0 = vector.load %arg1[%c0, %c0_0] : memref<128x128xf32, #tpu.memory_space<vmem>>, vector<128x128xf32>
    %c0_1 = arith.constant 0 : index
    %c0_2 = arith.constant 0 : index
    %1 = vector.load %arg2[%c0_1, %c0_2] : memref<128x128xbf16, #tpu.memory_space<vmem>>, vector<128x128xbf16>
    %c0_3 = arith.constant 0 : index
    %c0_4 = arith.constant 0 : index
    %2 = vector.load %arg3[%c0_3, %c0_4] : memref<128x128xbf16, #tpu.memory_space<vmem>>, vector<128x128xbf16>
    %c0_5 = arith.constant 0 : index
    %c0_6 = arith.constant 0 : index
    %3 = vector.load %arg4[%c0_5, %c0_6] : memref<128x128xbf16, #tpu.memory_space<vmem>>, vector<128x128xbf16>
    %4 = arith.extf %3 : vector<128x128xbf16> to vector<128x128xf32>
    %5 = arith.truncf %0 : vector<128x128xf32> to vector<128x128xbf16>
    %cst = arith.constant dense<0.000000e+00> : vector<128x128xf32>
    %6 = tpu.matmul %5, %1, %cst {dimension_numbers = #tpu.dot_dimension_numbers<[1], [0], [0], [1], [0, 0, 1, 1], [], []>} : vector<128x128xbf16>, vector<128x128xbf16>, vector<128x128xf32> -> vector<128x128xf32>
    %7 = arith.addf %6, %4 : vector<128x128xf32>
    %cst_7 = arith.constant dense<0xFF800000> : vector<128xf32>
    %8 = vector.multi_reduction <maximumf>, %7, %cst_7 [1] : vector<128x128xf32> to vector<128xf32>
    %9 = vector.shape_cast %8 : vector<128xf32> to vector<128x1xf32>
    %10 = vector.broadcast %9 : vector<128x1xf32> to vector<128x128xf32>
    %11 = arith.subf %7, %10 : vector<128x128xf32>
    %12 = math.exp %11 : vector<128x128xf32>
    %cst_8 = arith.constant dense<0.000000e+00> : vector<128xf32>
    %13 = vector.multi_reduction <add>, %12, %cst_8 [1] : vector<128x128xf32> to vector<128xf32>
    %14 = vector.shape_cast %13 : vector<128xf32> to vector<128x1xf32>
    %15 = arith.truncf %12 : vector<128x128xf32> to vector<128x128xbf16>
    %cst_9 = arith.constant dense<0.000000e+00> : vector<128x128xf32>
    %16 = tpu.matmul %15, %2, %cst_9 {dimension_numbers = #tpu.dot_dimension_numbers<[1], [0], [0], [1], [0, 0, 1, 1], [], []>} : vector<128x128xbf16>, vector<128x128xbf16>, vector<128x128xf32> -> vector<128x128xf32>
    %17 = tpu.reciprocal %14 {approx = true} : vector<128x1xf32> -> vector<128x1xf32>
    %18 = vector.broadcast %17 : vector<128x1xf32> to vector<128x128xf32>
    %19 = arith.mulf %16, %18 : vector<128x128xf32>
    %20 = tpu.iota {dimensions = array<i32: 1>} : vector<128x128xi32>
    %21 = vector.broadcast %9 : vector<128x1xf32> to vector<128x128xf32>
    %22 = arith.cmpf oeq, %7, %21 : vector<128x128xf32>
    %c128_i32 = arith.constant 128 : i32
    %23 = vector.broadcast %c128_i32 : i32 to vector<128x128xi32>
    %24 = arith.select %22, %20, %23 : vector<128x128xi1>, vector<128x128xi32>
    %cst_10 = arith.constant dense<2147483647> : vector<128xi32>
    %25 = vector.multi_reduction <minsi>, %24, %cst_10 [1] : vector<128x128xi32> to vector<128xi32>
    %26 = vector.shape_cast %25 : vector<128xi32> to vector<128x1xi32>
    %27 = arith.sitofp %26 : vector<128x1xi32> to vector<128x1xf32>
    %28 = arith.subf %19, %0 : vector<128x128xf32>
    %29 = math.absf %28 : vector<128x128xf32>
    %cst_11 = arith.constant dense<0.000000e+00> : vector<128xf32>
    %30 = vector.multi_reduction <add>, %29, %cst_11 [1] : vector<128x128xf32> to vector<128xf32>
    %31 = vector.shape_cast %30 : vector<128xf32> to vector<128x1xf32>
    %32 = tpu.iota {dimensions = array<i32: 1>} : vector<128x128xi32>
    %c32_i32 = arith.constant 32 : i32
    %33 = vector.broadcast %c32_i32 : i32 to vector<128x128xi32>
    %34 = arith.cmpi eq, %32, %33 : vector<128x128xi32>
    %35 = vector.shape_cast %27 : vector<128x1xf32> to vector<128x1xf32>
    %36 = vector.broadcast %35 : vector<128x1xf32> to vector<128x128xf32>
    %37 = arith.select %34, %36, %19 : vector<128x128xi1>, vector<128x128xf32>
    %c33_i32 = arith.constant 33 : i32
    %38 = vector.broadcast %c33_i32 : i32 to vector<128x128xi32>
    %39 = arith.cmpi eq, %32, %38 : vector<128x128xi32>
    %40 = vector.shape_cast %31 : vector<128x1xf32> to vector<128x1xf32>
    %41 = vector.broadcast %40 : vector<128x1xf32> to vector<128x128xf32>
    %42 = arith.select %39, %41, %37 : vector<128x128xi1>, vector<128x128xf32>
    %c0_12 = arith.constant 0 : index
    %c0_13 = arith.constant 0 : index
    %43 = vector.load %arg5[%c0_12, %c0_13] : memref<128x128xf32, #tpu.memory_space<vmem>>, vector<128x128xf32>
    tpu.vector_store %arg5[%c0_12, %c0_13], %42 {strides = array<i32>} : memref<128x128xf32, #tpu.memory_space<vmem>>, vector<128x128xf32>,
    return
  }
  func.func @transform_0(%arg0: i32) -> (i32, i32) {
    %c0_i32 = arith.constant 0 : i32
    %c0_i32_0 = arith.constant 0 : i32
    return %arg0, %c0_i32 : i32, i32
  }
  func.func @transform_1(%arg0: i32) -> (i32, i32) {
    %c0_i32 = arith.constant 0 : i32
    %c0_i32_0 = arith.constant 0 : i32
    %c0_i32_1 = arith.constant 0 : i32
    return %c0_i32, %c0_i32_0 : i32, i32
  }
  func.func @transform_2(%arg0: i32) -> (i32, i32) {
    %c0_i32 = arith.constant 0 : i32
    %c0_i32_0 = arith.constant 0 : i32
    %c0_i32_1 = arith.constant 0 : i32
    return %c0_i32, %c0_i32_0 : i32, i32
  }
  func.func @transform_3(%arg0: i32) -> (i32, i32) {
    %c0_i32 = arith.constant 0 : i32
    %c0_i32_0 = arith.constant 0 : i32
    return %arg0, %c0_i32 : i32, i32
  }
  func.func @transform_4(%arg0: i32) -> (i32, i32) {
    %c0_i32 = arith.constant 0 : i32
    %c0_i32_0 = arith.constant 0 : i32
    return %arg0, %c0_i32 : i32, i32
  }
}

</mosaic_0001>

<llo_original>
// kernel: tpu_custom_call.1
$region0: #{tpu_custom_call.1}
  #allocation0 [shape = 'u32[]', space=smem, size = 0x4, offset = 0x4, fixed_abs, tag = 'smem constant byte address 0x4 - core index']
  #allocation1 [shape = 'u32[72,128]{1,0:T(1,128)}', space=vmem, size = 0x9000, scoped, tag = 'internal scratch']
  %s0 = inlined_call_operand.hbm [shape: f32[384,128], index: 0, kind: input, shape index: {}]
  %s1 = inlined_call_operand.hbm [shape: bf16[128,128], index: 1, kind: input, shape index: {}]
  %s2 = inlined_call_operand.hbm [shape: bf16[128,128], index: 2, kind: input, shape index: {}]
  %s3 = inlined_call_operand.hbm [shape: bf16[384,128], index: 3, kind: input, shape index: {}]
  %s4 = inlined_call_operand.hbm [shape: f32[384,128], index: 4, kind: output, shape index: {}]
  %s5 = sld [smem:[#allocation0]]
  $region65: #{tpu_custom_call.1} parent=0
    _
  %s7 = ssub.s32 1, %s5
  %s8 = scalar_select 0, %s7, %s5
  $region1: #{tpu_custom_call.1} parent=0
    #allocation2 [shape = 'u8[131072]{0}', space=vmem, size = 0x20000, scoped, tag = 'input window, operand 0']
    #allocation3 [shape = 's32[2]{0}', space=sflag, size = 0x8, scoped, tag = 'scoped memory for tpu_custom_call.1']
    #allocation4 [shape = 's32[2]{0}', space=sflag, size = 0x8, scoped, tag = 'scoped memory for tpu_custom_call.1']
    #allocation5 [shape = 'u8[32768]{0}', space=vmem, size = 0x8000, scoped, tag = 'input window, operand 1, single buffered']
    #allocation6 [shape = 's32[1]{0}', space=sflag, size = 0x4, scoped, tag = 'scoped memory for tpu_custom_call.1']
    #allocation7 [shape = 'u8[32768]{0}', space=vmem, size = 0x8000, scoped, tag = 'input window, operand 2, single buffered']
    #allocation8 [shape = 'u8[65536]{0}', space=vmem, size = 0x10000, scoped, tag = 'input window, operand 3']
    #allocation9 [shape = 's32[2]{0}', space=sflag, size = 0x8, scoped, tag = 'scoped memory for tpu_custom_call.1']
    #allocation10 [shape = 'u8[131072]{0}', space=vmem, size = 0x20000, scoped, tag = 'output window, operand 0']
    %9 = vsyncpa [#allocation3], 0
    %s10 = scalar_lea.sflag [#allocation3], 1
    %11 = vsyncpa %s10, 0
    %12 = vsyncpa [#allocation6], 0
    %13 = vsyncpa [#allocation9], 0
    %s14 = scalar_lea.sflag [#allocation9], 1
    %15 = vsyncpa %s14, 0
    %16 = vsyncpa [#allocation4], 0
    %s17 = scalar_lea.sflag [#allocation4], 1
    %18 = vsyncpa %s17, 0
    loop: start=0, step=1, limit=5
    $region2: #{tpu_custom_call.1} parent=1 // loop_pre_header
      _
    $region3: #{tpu_custom_call.1} parent=1 // loop_header
      %s20 = sphi 0, %s24
      %p21 = scmp.ge.s32.totalorder %s20, 5
      %s30 = sphi 0, %s32
      %s33 = sphi 0, %s30
      %s34 = sphi 0, %s33
      %s50 = sphi 0, %s34
      %s54 = sphi 0, %s54
      %s56 = sphi 0, %s54
      %s57 = sphi 0, %s56
      %s71 = sphi 0, %s57
      %s75 = sphi 0, %s75
      %s77 = sphi 0, %s75
      %s78 = sphi 0, %s77
      %s92 = sphi 0, %s78
      %s98 = sphi 0, %s100
      %s101 = sphi 0, %s98
      %s102 = sphi 0, %s101
      %s118 = sphi 0, %s102
      %s124 = sphi 0, %s126
      %s127 = sphi 0, %s124
      %s128 = sphi 0, %s127
      %s144 = sphi 0, %s128
    $region4: #{tpu_custom_call.1} parent=1 // loop_header_branch
      %23 = sbr.rel (%p21) target = $region8
    $region5: #{tpu_custom_call.1} parent=1 // loop_body
      %s25 = ssub.s32 %s20, 1
      %s26 = ssub.s32 %s20, 2
      %s27 = sadd.s32 %s20, 1
      %s28 = ssub.s32 %s20, %s27
      %p29 = scmp.eq.s32.totalorder %s28, 0
      %s31 = sadd.s32 %s30, 1
      %s32 = scalar_select %p29, %s30, %s31
      %p35 = pneg %p29
      %p36 = scmp.eq.s32.totalorder %s20, 2
      %p37 = por %p35, %p36
      %p38 = scmp.ne.s32.totalorder %s30, %s33
      %p39 = scmp.eq.s32.totalorder %s20, 0
      %p40 = por %p38, %p39
      %p41 = scmp.ne.s32.totalorder %s30, %s33
      %p42 = scmp.eq.s32.totalorder %s25, 2
      %p43 = por %p41, %p42
      %p44 = scmp.ne.s32.totalorder %s33, %s34
      %p45 = scmp.eq.s32.totalorder %s25, 0
      %p46 = por %p44, %p45
      %p47 = scmp.ne.s32.totalorder %s33, %s34
      %p48 = scmp.eq.s32.totalorder %s26, 2
      %p49 = por %p47, %p48
      %p51 = scmp.ne.s32.totalorder %s34, %s50
      %p52 = scmp.eq.s32.totalorder %s26, 0
      %p53 = por %p51, %p52
      %s55 = sadd.s32 %s54, 1
      %p58 = scmp.eq.s32.totalorder %s20, 2
      %p59 = scmp.ne.s32.totalorder %s54, %s56
      %p60 = scmp.eq.s32.totalorder %s20, 0
      %p61 = por %p59, %p60
      %p62 = scmp.ne.s32.totalorder %s54, %s56
      %p63 = scmp.eq.s32.totalorder %s25, 2
      %p64 = por %p62, %p63
      %p65 = scmp.ne.s32.totalorder %s56, %s57
      %p66 = scmp.eq.s32.totalorder %s25, 0
      %p67 = por %p65, %p66
      %p68 = scmp.ne.s32.totalorder %s56, %s57
      %p69 = scmp.eq.s32.totalorder %s26, 2
      %p70 = por %p68, %p69
      %p72 = scmp.ne.s32.totalorder %s57, %s71
      %p73 = scmp.eq.s32.totalorder %s26, 0
      %p74 = por %p72, %p73
      %s76 = sadd.s32 %s75, 1
      %p79 = scmp.eq.s32.totalorder %s20, 2
      %p80 = scmp.ne.s32.totalorder %s75, %s77
      %p81 = scmp.eq.s32.totalorder %s20, 0
      %p82 = por %p80, %p81
      %p83 = scmp.ne.s32.totalorder %s75, %s77
      %p84 = scmp.eq.s32.totalorder %s25, 2
      %p85 = por %p83, %p84
      %p86 = scmp.ne.s32.totalorder %s77, %s78
      %p87 = scmp.eq.s32.totalorder %s25, 0
      %p88 = por %p86, %p87
      %p89 = scmp.ne.s32.totalorder %s77, %s78
      %p90 = scmp.eq.s32.totalorder %s26, 2
      %p91 = por %p89, %p90
      %p93 = scmp.ne.s32.totalorder %s78, %s92
      %p94 = scmp.eq.s32.totalorder %s26, 0
      %p95 = por %p93, %p94
      %s96 = ssub.s32 %s20, %s27
      %p97 = scmp.eq.s32.totalorder %s96, 0
      %s99 = sadd.s32 %s98, 1
      %s100 = scalar_select %p97, %s98, %s99
      %p103 = pneg %p97
      %p104 = scmp.eq.s32.totalorder %s20, 2
      %p105 = por %p103, %p104
      %p106 = scmp.ne.s32.totalorder %s98, %s101
      %p107 = scmp.eq.s32.totalorder %s20, 0
      %p108 = por %p106, %p107
      %p109 = scmp.ne.s32.totalorder %s98, %s101
      %p110 = scmp.eq.s32.totalorder %s25, 2
      %p111 = por %p109, %p110
      %p112 = scmp.ne.s32.totalorder %s101, %s102
      %p113 = scmp.eq.s32.totalorder %s25, 0
      %p114 = por %p112, %p113
      %p115 = scmp.ne.s32.totalorder %s101, %s102
      %p116 = scmp.eq.s32.totalorder %s26, 2
      %p117 = por %p115, %p116
      %p119 = scmp.ne.s32.totalorder %s102, %s118
      %p120 = scmp.eq.s32.totalorder %s26, 0
      %p121 = por %p119, %p120
      %s122 = ssub.s32 %s20, %s27
      %p123 = scmp.eq.s32.totalorder %s122, 0
      %s125 = sadd.s32 %s124, 1
      %s126 = scalar_select %p123, %s124, %s125
      %p129 = pneg %p123
      %p130 = scmp.eq.s32.totalorder %s20, 2
      %p131 = por %p129, %p130
      %p132 = scmp.ne.s32.totalorder %s124, %s127
      %p133 = scmp.eq.s32.totalorder %s20, 0
      %p134 = por %p132, %p133
      %p135 = scmp.ne.s32.totalorder %s124, %s127
      %p136 = scmp.eq.s32.totalorder %s25, 2
      %p137 = por %p135, %p136
      %p138 = scmp.ne.s32.totalorder %s127, %s128
      %p139 = scmp.eq.s32.totalorder %s25, 0
      %p140 = por %p138, %p139
      %p141 = scmp.ne.s32.totalorder %s127, %s128
      %p142 = scmp.eq.s32.totalorder %s26, 2
      %p143 = por %p141, %p142
      %p145 = scmp.ne.s32.totalorder %s128, %s144
      %p146 = scmp.eq.s32.totalorder %s26, 0
      %p147 = por %p145, %p146
      %p148 = scmp.le.s32.totalorder 1, %s20
      %p149 = scmp.lt.s32.totalorder %s20, 4
      %p150 = pnand %p148, %p149
      %p151 = pneg %p150
      // Predicated region
      $region9: #{tpu_custom_call.1} parent=5 // pred_check
        _
      $region10: #{tpu_custom_call.1} parent=5 // pred_check_branch
        %153 = sbr.rel (%p150) target = $region12
      $region11: #{tpu_custom_call.1} parent=5 // pred_region
        %s154 = ssub.s32 %s20, 1
        // Predicated region
        $region13: #{tpu_custom_call.1} parent=11 // pred_check
          %p155 = pneg %p67
        $region14: #{tpu_custom_call.1} parent=11 // pred_check_branch
          %157 = sbr.rel (%p155) target = $region16
        $region15: #{tpu_custom_call.1} parent=11 // pred_region
          %159 = vsyncadd [#allocation6], 0
          %s160 = sshll.u32 %s1, 4
          %s161 = int_to_ptr.hbm [resolvable:$true] %s160
          %s162 = sshll.u32 [#allocation5], 4
          %s163 = int_to_ptr.vmem [resolvable:$true] %s162
          %168 = dma.hbm_to_vmem [thread:$0]  %s161, 1024, %s163, [#allocation6], 64, 64, 4
        $region16: #{tpu_custom_call.1} parent=11 // pred_fallthru
          _
        // Predicated region
        $region17: #{tpu_custom_call.1} parent=11 // pred_check
          %p169 = pneg %p88
        $region18: #{tpu_custom_call.1} parent=11 // pred_check_branch
          %171 = sbr.rel (%p169) target = $region20
        $region19: #{tpu_custom_call.1} parent=11 // pred_region
          %173 = vsyncadd [#allocation6], 0
          %s174 = sshll.u32 %s2, 4
          %s175 = int_to_ptr.hbm [resolvable:$true] %s174
          %s176 = sshll.u32 [#allocation7], 4
          %s177 = int_to_ptr.vmem [resolvable:$true] %s176
          %182 = dma.hbm_to_vmem [thread:$0]  %s175, 1024, %s177, [#allocation6], 64, 64, 4
        $region20: #{tpu_custom_call.1} parent=11 // pred_fallthru
          _
      $region12: #{tpu_custom_call.1} parent=5 // pred_fallthru
        _
      %p183 = scmp.lt.s32.totalorder %s20, 3
      // Predicated region
      $region21: #{tpu_custom_call.1} parent=5 // pred_check
        %p184 = pneg %p183
      $region22: #{tpu_custom_call.1} parent=5 // pred_check_branch
        %186 = sbr.rel (%p184) target = $region24
      $region23: #{tpu_custom_call.1} parent=5 // pred_region
        // Predicated region
        $region25: #{tpu_custom_call.1} parent=23 // pred_check
          %p187 = pneg %p40
        $region26: #{tpu_custom_call.1} parent=23 // pred_check_branch
          %189 = sbr.rel (%p187) target = $region28
        $region27: #{tpu_custom_call.1} parent=23 // pred_region
          %s190 = sand.u32 %s30, 1
          %s191 = scalar_lea.sflag [#allocation3], %s190
          %s192 = sand.u32 %s30, 1
          %s193 = smul.addr %s192, 128
          %s194 = scalar_lea.vmem [#allocation2], %s193
          %s195 = smul.u32 16, %s20
          %197 = vsyncadd %s191, 0
          %s198 = smul.addr %s195, 8
          %s199 = scalar_lea.hbm %s0, %s198
          %s200 = sshll.u32 %s199, 4
          %s201 = int_to_ptr.hbm [resolvable:$true] %s200
          %s202 = sshll.u32 %s194, 4
          %s203 = int_to_ptr.vmem [resolvable:$true] %s202
          %208 = dma.hbm_to_vmem [thread:$0]  %s201, 2048, %s203, %s191, 128, 128, 8
        $region28: #{tpu_custom_call.1} parent=23 // pred_fallthru
          _
        // Predicated region
        $region29: #{tpu_custom_call.1} parent=23 // pred_check
          %p209 = pneg %p108
        $region30: #{tpu_custom_call.1} parent=23 // pred_check_branch
          %211 = sbr.rel (%p209) target = $region32
        $region31: #{tpu_custom_call.1} parent=23 // pred_region
          %s212 = sand.u32 %s98, 1
          %s213 = scalar_lea.sflag [#allocation9], %s212
          %s214 = sand.u32 %s98, 1
          %s215 = smul.addr %s214, 64
          %s216 = scalar_lea.vmem [#allocation8], %s215
          %s217 = smul.u32 16, %s20
          %219 = vsyncadd %s213, 0
          %s220 = smul.addr %s217, 4
          %s221 = scalar_lea.hbm %s3, %s220
          %s222 = sshll.u32 %s221, 4
          %s223 = int_to_ptr.hbm [resolvable:$true] %s222
          %s224 = sshll.u32 %s216, 4
          %s225 = int_to_ptr.vmem [resolvable:$true] %s224
          %230 = dma.hbm_to_vmem [thread:$0]  %s223, 1024, %s225, %s213, 64, 64, 4
        $region32: #{tpu_custom_call.1} parent=23 // pred_fallthru
          _
      $region24: #{tpu_custom_call.1} parent=5 // pred_fallthru
        _
      %p231 = scmp.le.s32.totalorder 1, %s20
      %p232 = scmp.lt.s32.totalorder %s20, 4
      %p233 = pnand %p231, %p232
      %p234 = pneg %p233
      // Predicated region
      $region33: #{tpu_custom_call.1} parent=5 // pred_check
        _
      $region34: #{tpu_custom_call.1} parent=5 // pred_check_branch
        %236 = sbr.rel (%p233) target = $region36
      $region35: #{tpu_custom_call.1} parent=5 // pred_region
        %s237 = ssub.s32 %s20, 1
        %s238 = sand.u32 %s33, 1
        %s239 = scalar_lea.sflag [#allocation3], %s238
        %s240 = sand.u32 %s33, 1
        %s241 = smul.addr %s240, 128
        %s242 = scalar_lea.vmem [#allocation2], %s241
        // Predicated region
        $region37: #{tpu_custom_call.1} parent=35 // pred_check
          %p243 = pneg %p46
        $region38: #{tpu_custom_call.1} parent=35 // pred_check_branch
          %245 = sbr.rel (%p243) target = $region40
        $region39: #{tpu_custom_call.1} parent=35 // pred_region
          %247 = dma.done %s239, 2048
        $region40: #{tpu_custom_call.1} parent=35 // pred_fallthru
          _
        // Predicated region
        $region41: #{tpu_custom_call.1} parent=35 // pred_check
          %p248 = pneg %p67
        $region42: #{tpu_custom_call.1} parent=35 // pred_check_branch
          %250 = sbr.rel (%p248) target = $region44
        $region43: #{tpu_custom_call.1} parent=35 // pred_region
          %252 = dma.done [#allocation6], 1024
        $region44: #{tpu_custom_call.1} parent=35 // pred_fallthru
          _
        // Predicated region
        $region45: #{tpu_custom_call.1} parent=35 // pred_check
          %p253 = pneg %p88
        $region46: #{tpu_custom_call.1} parent=35 // pred_check_branch
          %255 = sbr.rel (%p253) target = $region48
        $region47: #{tpu_custom_call.1} parent=35 // pred_region
          %257 = dma.done [#allocation6], 1024
        $region48: #{tpu_custom_call.1} parent=35 // pred_fallthru
          _
        %s258 = sand.u32 %s101, 1
        %s259 = scalar_lea.sflag [#allocation9], %s258
        %s260 = sand.u32 %s101, 1
        %s261 = smul.addr %s260, 64
        %s262 = scalar_lea.vmem [#allocation8], %s261
        // Predicated region
        $region49: #{tpu_custom_call.1} parent=35 // pred_check
          %p263 = pneg %p114
        $region50: #{tpu_custom_call.1} parent=35 // pred_check_branch
          %265 = sbr.rel (%p263) target = $region52
        $region51: #{tpu_custom_call.1} parent=35 // pred_region
          %267 = dma.done %s259, 1024
        $region52: #{tpu_custom_call.1} parent=35 // pred_fallthru
          _
        %s268 = sand.u32 %s33, 1
        %s269 = scalar_lea.sflag [#allocation3], %s268
        %s270 = sand.u32 %s33, 1
        %s271 = smul.addr %s270, 128
        %s272 = scalar_lea.vmem [#allocation2], %s271
        %p273 = pneg %p46
        %p274 = pneg %p43
        %p275 = pneg %p67
        %p276 = pneg %p64
        %p277 = pneg %p88
        %p278 = pneg %p85
        %s279 = sand.u32 %s101, 1
        %s280 = scalar_lea.sflag [#allocation9], %s279
        %s281 = sand.u32 %s101, 1
        %s282 = smul.addr %s281, 64
        %s283 = scalar_lea.vmem [#allocation8], %s282
        %p284 = pneg %p114
        %p285 = pneg %p111
        %p286 = pneg %p140
        %p287 = pneg %p137
        %s288 = sand.u32 %s127, 1
        %s289 = scalar_lea.sflag [#allocation4], %s288
        %s290 = sand.u32 %s127, 1
        %s291 = smul.addr %s290, 128
        %s292 = scalar_lea.vmem [#allocation10], %s291
        %s293 = smul.u32 16, %s25
        %s294 = smul.u32 16, %s25
        %s295 = smul.u32 16, %s25
        %v296 = vld [vmem:[%s242] sm:$0xff]
        %v297 = vld [vmem:[%s242 + $0x8] sm:$0xff]
        %v298 = vld [vmem:[%s242 + $0x10] sm:$0xff]
        %v299 = vld [vmem:[%s242 + $0x18] sm:$0xff]
        %v300 = vld [vmem:[%s242 + $0x20] sm:$0xff]
        %v301 = vld [vmem:[%s242 + $0x28] sm:$0xff]
        %v302 = vld [vmem:[%s242 + $0x30] sm:$0xff]
        %v303 = vld [vmem:[%s242 + $0x38] sm:$0xff]
        %v304 = vld [vmem:[%s242 + $0x40] sm:$0xff]
        %v305 = vld [vmem:[%s242 + $0x48] sm:$0xff]
        %v306 = vld [vmem:[%s242 + $0x50] sm:$0xff]
        %v307 = vld [vmem:[%s242 + $0x58] sm:$0xff]
        %v308 = vld [vmem:[%s242 + $0x60] sm:$0xff]
        %v309 = vld [vmem:[%s242 + $0x68] sm:$0xff]
        %v310 = vld [vmem:[%s242 + $0x70] sm:$0xff]
        %v311 = vld [vmem:[%s242 + $0x78] sm:$0xff]
        %v312 = vld [vmem:[#allocation5] sm:$0xf]
        %v313 = vld [vmem:[#allocation5 + $0x4] sm:$0xf]
        %v314 = vld [vmem:[#allocation5 + $0x8] sm:$0xf]
        %v315 = vld [vmem:[#allocation5 + $0xc] sm:$0xf]
        %v316 = vld [vmem:[#allocation5 + $0x10] sm:$0xf]
        %v317 = vld [vmem:[#allocation5 + $0x14] sm:$0xf]
        %v318 = vld [vmem:[#allocation5 + $0x18] sm:$0xf]
        %v319 = vld [vmem:[#allocation5 + $0x1c] sm:$0xf]
        %v320 = vld [vmem:[#allocation5 + $0x20] sm:$0xf]
        %v321 = vld [vmem:[#allocation5 + $0x24] sm:$0xf]
        %v322 = vld [vmem:[#allocation5 + $0x28] sm:$0xf]
        %v323 = vld [vmem:[#allocation5 + $0x2c] sm:$0xf]
        %v324 = vld [vmem:[#allocation5 + $0x30] sm:$0xf]
        %v325 = vld [vmem:[#allocation5 + $0x34] sm:$0xf]
        %v326 = vld [vmem:[#allocation5 + $0x38] sm:$0xf]
        %v327 = vld [vmem:[#allocation5 + $0x3c] sm:$0xf]
        %v328 = vld [vmem:[#allocation7] sm:$0xf]
        %v329 = vld [vmem:[#allocation7 + $0x4] sm:$0xf]
        %v330 = vld [vmem:[#allocation7 + $0x8] sm:$0xf]
        %v331 = vld [vmem:[#allocation7 + $0xc] sm:$0xf]
        %v332 = vld [vmem:[#allocation7 + $0x10] sm:$0xf]
        %v333 = vld [vmem:[#allocation7 + $0x14] sm:$0xf]
        %v334 = vld [vmem:[#allocation7 + $0x18] sm:$0xf]
        %v335 = vld [vmem:[#allocation7 + $0x1c] sm:$0xf]
        %v336 = vld [vmem:[#allocation7 + $0x20] sm:$0xf]
        %v337 = vld [vmem:[#allocation7 + $0x24] sm:$0xf]
        %v338 = vld [vmem:[#allocation7 + $0x28] sm:$0xf]
        %v339 = vld [vmem:[#allocation7 + $0x2c] sm:$0xf]
        %v340 = vld [vmem:[#allocation7 + $0x30] sm:$0xf]
        %v341 = vld [vmem:[#allocation7 + $0x34] sm:$0xf]
        %v342 = vld [vmem:[#allocation7 + $0x38] sm:$0xf]
        %v343 = vld [vmem:[#allocation7 + $0x3c] sm:$0xf]
        %v344 = vld [vmem:[%s262] sm:$0xf]
        %v345 = vld [vmem:[%s262 + $0x4] sm:$0xf]
        %v346 = vld [vmem:[%s262 + $0x8] sm:$0xf]
        %v347 = vld [vmem:[%s262 + $0xc] sm:$0xf]
        %v348 = vld [vmem:[%s262 + $0x10] sm:$0xf]
        %v349 = vld [vmem:[%s262 + $0x14] sm:$0xf]
        %v350 = vld [vmem:[%s262 + $0x18] sm:$0xf]
        %v351 = vld [vmem:[%s262 + $0x1c] sm:$0xf]
        %v352 = vld [vmem:[%s262 + $0x20] sm:$0xf]
        %v353 = vld [vmem:[%s262 + $0x24] sm:$0xf]
        %v354 = vld [vmem:[%s262 + $0x28] sm:$0xf]
        %v355 = vld [vmem:[%s262 + $0x2c] sm:$0xf]
        %v356 = vld [vmem:[%s262 + $0x30] sm:$0xf]
        %v357 = vld [vmem:[%s262 + $0x34] sm:$0xf]
        %v358 = vld [vmem:[%s262 + $0x38] sm:$0xf]
        %v359 = vld [vmem:[%s262 + $0x3c] sm:$0xf]
        %v360 = vunpack.c.l.bf16 %v344
        %v361 = vunpack.c.l.bf16 %v345
        %v362 = vunpack.c.l.bf16 %v346
        %v363 = vunpack.c.l.bf16 %v347
        %v364 = vunpack.c.l.bf16 %v348
        %v365 = vunpack.c.l.bf16 %v349
        %v366 = vunpack.c.l.bf16 %v350
        %v367 = vunpack.c.l.bf16 %v351
        %v368 = vunpack.c.l.bf16 %v352
        %v369 = vunpack.c.l.bf16 %v353
        %v370 = vunpack.c.l.bf16 %v354
        %v371 = vunpack.c.l.bf16 %v355
        %v372 = vunpack.c.l.bf16 %v356
        %v373 = vunpack.c.l.bf16 %v357
        %v374 = vunpack.c.l.bf16 %v358
        %v375 = vunpack.c.l.bf16 %v359
        %v376 = vpack.c.bf16 %v297, %v296
        %v377 = vpack.c.bf16 %v299, %v298
        %v378 = vpack.c.bf16 %v301, %v300
        %v379 = vpack.c.bf16 %v303, %v302
        %v380 = vpack.c.bf16 %v305, %v304
        %v381 = vpack.c.bf16 %v307, %v306
        %v382 = vpack.c.bf16 %v309, %v308
        %v383 = vpack.c.bf16 %v311, %v310
        %v400 = vunpack.c.l.b16 %v312
        %v401 = vunpack.c.l.b16 %v313
        %v402 = vunpack.c.l.b16 %v314
        %v403 = vunpack.c.l.b16 %v315
        %v404 = vunpack.c.l.b16 %v316
        %v405 = vunpack.c.l.b16 %v317
        %v406 = vunpack.c.l.b16 %v318
        %v407 = vunpack.c.l.b16 %v319
        %v408 = vunpack.c.l.b16 %v320
        %v409 = vunpack.c.l.b16 %v321
        %v410 = vunpack.c.l.b16 %v322
        %v411 = vunpack.c.l.b16 %v323
        %v412 = vunpack.c.l.b16 %v324
        %v413 = vunpack.c.l.b16 %v325
        %v414 = vunpack.c.l.b16 %v326
        %v415 = vunpack.c.l.b16 %v327
        %v416 = vpack.c.b16 %v401, %v400
        %v417 = vpack.c.b16 %v403, %v402
        %v418 = vpack.c.b16 %v405, %v404
        %v419 = vpack.c.b16 %v407, %v406
        %v420 = vpack.c.b16 %v409, %v408
        %v421 = vpack.c.b16 %v411, %v410
        %v422 = vpack.c.b16 %v413, %v412
        %v423 = vpack.c.b16 %v415, %v414
        %432 = vmatpush.bf16.msra.mxu0 %v423
        %433 = vmatpush.bf16.msra.mxu0 %v422
        %434 = vmatpush.bf16.msra.mxu0 %v421
        %435 = vmatpush.bf16.msra.mxu0 %v420
        %436 = vmatpush.bf16.msra.mxu0 %v419
        %437 = vmatpush.bf16.msra.mxu0 %v418
        %438 = vmatpush.bf16.msra.mxu0 %v417
        %439 = vmatpush.bf16.msra.mxu0 %v416
        %440 = vmatmul.bf16.gmra.mxu0 %v376
        %v441 = vpop.f32.mrf.mxu0
        %v442 = vadd.f32 %v360, %v441
        %v443 = vpop.f32.mrf.mxu0
        %v444 = vadd.f32 %v361, %v443
        %445 = vmatmul.bf16.gmra.mxu0 %v377
        %v446 = vpop.f32.mrf.mxu0
        %v447 = vadd.f32 %v362, %v446
        %v448 = vpop.f32.mrf.mxu0
        %v449 = vadd.f32 %v363, %v448
        %450 = vmatmul.bf16.gmra.mxu0 %v378
        %v451 = vpop.f32.mrf.mxu0
        %v452 = vadd.f32 %v364, %v451
        %v453 = vpop.f32.mrf.mxu0
        %v454 = vadd.f32 %v365, %v453
        %455 = vmatmul.bf16.gmra.mxu0 %v379
        %v456 = vpop.f32.mrf.mxu0
        %v457 = vadd.f32 %v366, %v456
        %v458 = vpop.f32.mrf.mxu0
        %v459 = vadd.f32 %v367, %v458
        %460 = vmatmul.bf16.gmra.mxu0 %v380
        %v461 = vpop.f32.mrf.mxu0
        %v462 = vadd.f32 %v368, %v461
        %v463 = vpop.f32.mrf.mxu0
        %v464 = vadd.f32 %v369, %v463
        %465 = vmatmul.bf16.gmra.mxu0 %v381
        %v466 = vpop.f32.mrf.mxu0
        %v467 = vadd.f32 %v370, %v466
        %v468 = vpop.f32.mrf.mxu0
        %v469 = vadd.f32 %v371, %v468
        %470 = vmatmul.bf16.gmra.mxu0 %v382
        %v471 = vpop.f32.mrf.mxu0
        %v472 = vadd.f32 %v372, %v471
        %v473 = vpop.f32.mrf.mxu0
        %v474 = vadd.f32 %v373, %v473
        %475 = vmatmul.bf16.gmra.mxu0 %v383
        %v476 = vpop.f32.mrf.mxu0
        %v477 = vadd.f32 %v374, %v476
        %v478 = vpop.f32.mrf.mxu0
        %v479 = vadd.f32 %v375, %v478
        %480 = vdwg.mxu0
        %481 = vmax.xlane.f32.xlu0 %v442
        %v482 = vpop.xlane.xlu0 %481
        %483 = vmax.xlane.f32.xlu0 %v444
        %v484 = vpop.xlane.xlu0 %483
        %485 = vmax.xlane.f32.xlu0 %v447
        %v486 = vpop.xlane.xlu0 %485
        %487 = vmax.xlane.f32.xlu0 %v449
        %v488 = vpop.xlane.xlu0 %487
        %489 = vmax.xlane.f32.xlu0 %v452
        %v490 = vpop.xlane.xlu0 %489
        %491 = vmax.xlane.f32.xlu0 %v454
        %v492 = vpop.xlane.xlu0 %491
        %493 = vmax.xlane.f32.xlu0 %v457
        %v494 = vpop.xlane.xlu0 %493
        %495 = vmax.xlane.f32.xlu0 %v459
        %v496 = vpop.xlane.xlu0 %495
        %497 = vmax.xlane.f32.xlu0 %v462
        %v498 = vpop.xlane.xlu0 %497
        %499 = vmax.xlane.f32.xlu0 %v464
        %v500 = vpop.xlane.xlu0 %499
        %501 = vmax.xlane.f32.xlu0 %v467
        %v502 = vpop.xlane.xlu0 %501
        %503 = vmax.xlane.f32.xlu0 %v469
        %v504 = vpop.xlane.xlu0 %503
        %505 = vmax.xlane.f32.xlu0 %v472
        %v506 = vpop.xlane.xlu0 %505
        %507 = vmax.xlane.f32.xlu0 %v474
        %v508 = vpop.xlane.xlu0 %507
        %509 = vmax.xlane.f32.xlu0 %v477
        %v510 = vpop.xlane.xlu0 %509
        %511 = vmax.xlane.f32.xlu0 %v479
        %v512 = vpop.xlane.xlu0 %511
        %v513 = vsub.f32 %v442, %v482
        %v514 = vsub.f32 %v444, %v484
        %v515 = vsub.f32 %v447, %v486
        %v516 = vsub.f32 %v449, %v488
        %v517 = vsub.f32 %v452, %v490
        %v518 = vsub.f32 %v454, %v492
        %v519 = vsub.f32 %v457, %v494
        %v520 = vsub.f32 %v459, %v496
        %v521 = vsub.f32 %v462, %v498
        %v522 = vsub.f32 %v464, %v500
        %v523 = vsub.f32 %v467, %v502
        %v524 = vsub.f32 %v469, %v504
        %v525 = vsub.f32 %v472, %v506
        %v526 = vsub.f32 %v474, %v508
        %v527 = vsub.f32 %v477, %v510
        %v528 = vsub.f32 %v479, %v512
        %v529 = vmul.f32 %v513, 1.442695
        %v530 = vpow.pop %v529
        %v531 = vmul.f32 %v514, 1.442695
        %v532 = vpow.pop %v531
        %v533 = vmul.f32 %v515, 1.442695
        %v534 = vpow.pop %v533
        %v535 = vmul.f32 %v516, 1.442695
        %v536 = vpow.pop %v535
        %v537 = vmul.f32 %v517, 1.442695
        %v538 = vpow.pop %v537
        %v539 = vmul.f32 %v518, 1.442695
        %v540 = vpow.pop %v539
        %v541 = vmul.f32 %v519, 1.442695
        %v542 = vpow.pop %v541
        %v543 = vmul.f32 %v520, 1.442695
        %v544 = vpow.pop %v543
        %v545 = vmul.f32 %v521, 1.442695
        %v546 = vpow.pop %v545
        %v547 = vmul.f32 %v522, 1.442695
        %v548 = vpow.pop %v547
        %v549 = vmul.f32 %v523, 1.442695
        %v550 = vpow.pop %v549
        %v551 = vmul.f32 %v524, 1.442695
        %v552 = vpow.pop %v551
        %v553 = vmul.f32 %v525, 1.442695
        %v554 = vpow.pop %v553
        %v555 = vmul.f32 %v526, 1.442695
        %v556 = vpow.pop %v555
        %v557 = vmul.f32 %v527, 1.442695
        %v558 = vpow.pop %v557
        %v559 = vmul.f32 %v528, 1.442695
        %v560 = vpow.pop %v559
        %561 = vadd.xlane.f32.xlu0 %v530
        %v562 = vpop.xlane.xlu0 %561
        %563 = vadd.xlane.f32.xlu0 %v532
        %v564 = vpop.xlane.xlu0 %563
        %565 = vadd.xlane.f32.xlu0 %v534
        %v566 = vpop.xlane.xlu0 %565
        %567 = vadd.xlane.f32.xlu0 %v536
        %v568 = vpop.xlane.xlu0 %567
        %569 = vadd.xlane.f32.xlu0 %v538
        %v570 = vpop.xlane.xlu0 %569
        %571 = vadd.xlane.f32.xlu0 %v540
        %v572 = vpop.xlane.xlu0 %571
        %573 = vadd.xlane.f32.xlu0 %v542
        %v574 = vpop.xlane.xlu0 %573
        %575 = vadd.xlane.f32.xlu0 %v544
        %v576 = vpop.xlane.xlu0 %575
        %577 = vadd.xlane.f32.xlu0 %v546
        %v578 = vpop.xlane.xlu0 %577
        %579 = vadd.xlane.f32.xlu0 %v548
        %v580 = vpop.xlane.xlu0 %579
        %581 = vadd.xlane.f32.xlu0 %v550
        %v582 = vpop.xlane.xlu0 %581
        %583 = vadd.xlane.f32.xlu0 %v552
        %v584 = vpop.xlane.xlu0 %583
        %585 = vadd.xlane.f32.xlu0 %v554
        %v586 = vpop.xlane.xlu0 %585
        %587 = vadd.xlane.f32.xlu0 %v556
        %v588 = vpop.xlane.xlu0 %587
        %589 = vadd.xlane.f32.xlu0 %v558
        %v590 = vpop.xlane.xlu0 %589
        %591 = vadd.xlane.f32.xlu0 %v560
        %v592 = vpop.xlane.xlu0 %591
        %v593 = vpack.c.bf16 %v532, %v530
        %v594 = vpack.c.bf16 %v536, %v534
        %v595 = vpack.c.bf16 %v540, %v538
        %v596 = vpack.c.bf16 %v544, %v542
        %v597 = vpack.c.bf16 %v548, %v546
        %v598 = vpack.c.bf16 %v552, %v550
        %v599 = vpack.c.bf16 %v556, %v554
        %v600 = vpack.c.bf16 %v560, %v558
        %v617 = vunpack.c.l.b16 %v328
        %v618 = vunpack.c.l.b16 %v329
        %v619 = vunpack.c.l.b16 %v330
        %v620 = vunpack.c.l.b16 %v331
        %v621 = vunpack.c.l.b16 %v332
        %v622 = vunpack.c.l.b16 %v333
        %v623 = vunpack.c.l.b16 %v334
        %v624 = vunpack.c.l.b16 %v335
        %v625 = vunpack.c.l.b16 %v336
        %v626 = vunpack.c.l.b16 %v337
        %v627 = vunpack.c.l.b16 %v338
        %v628 = vunpack.c.l.b16 %v339
        %v629 = vunpack.c.l.b16 %v340
        %v630 = vunpack.c.l.b16 %v341
        %v631 = vunpack.c.l.b16 %v342
        %v632 = vunpack.c.l.b16 %v343
        %v633 = vpack.c.b16 %v618, %v617
        %v634 = vpack.c.b16 %v620, %v619
        %v635 = vpack.c.b16 %v622, %v621
        %v636 = vpack.c.b16 %v624, %v623
        %v637 = vpack.c.b16 %v626, %v625
        %v638 = vpack.c.b16 %v628, %v627
        %v639 = vpack.c.b16 %v630, %v629
        %v640 = vpack.c.b16 %v632, %v631
        %649 = vmatpush.bf16.msra.mxu0 %v640
        %650 = vmatpush.bf16.msra.mxu0 %v639
        %651 = vmatpush.bf16.msra.mxu0 %v638
        %652 = vmatpush.bf16.msra.mxu0 %v637
        %653 = vmatpush.bf16.msra.mxu0 %v636
        %654 = vmatpush.bf16.msra.mxu0 %v635
        %655 = vmatpush.bf16.msra.mxu0 %v634
        %656 = vmatpush.bf16.msra.mxu0 %v633
        %657 = vmatmul.bf16.gmra.mxu0 %v593
        %v658 = vpop.f32.mrf.mxu0
        %v659 = vadd.f32 0.0, %v658
        %v660 = vpop.f32.mrf.mxu0
        %v661 = vadd.f32 0.0, %v660
        %662 = vmatmul.bf16.gmra.mxu0 %v594
        %v663 = vpop.f32.mrf.mxu0
        %v664 = vadd.f32 0.0, %v663
        %v665 = vpop.f32.mrf.mxu0
        %v666 = vadd.f32 0.0, %v665
        %667 = vmatmul.bf16.gmra.mxu0 %v595
        %v668 = vpop.f32.mrf.mxu0
        %v669 = vadd.f32 0.0, %v668
        %v670 = vpop.f32.mrf.mxu0
        %v671 = vadd.f32 0.0, %v670
        %672 = vmatmul.bf16.gmra.mxu0 %v596
        %v673 = vpop.f32.mrf.mxu0
        %v674 = vadd.f32 0.0, %v673
        %v675 = vpop.f32.mrf.mxu0
        %v676 = vadd.f32 0.0, %v675
        %677 = vmatmul.bf16.gmra.mxu0 %v597
        %v678 = vpop.f32.mrf.mxu0
        %v679 = vadd.f32 0.0, %v678
        %v680 = vpop.f32.mrf.mxu0
        %v681 = vadd.f32 0.0, %v680
        %682 = vmatmul.bf16.gmra.mxu0 %v598
        %v683 = vpop.f32.mrf.mxu0
        %v684 = vadd.f32 0.0, %v683
        %v685 = vpop.f32.mrf.mxu0
        %v686 = vadd.f32 0.0, %v685
        %687 = vmatmul.bf16.gmra.mxu0 %v599
        %v688 = vpop.f32.mrf.mxu0
        %v689 = vadd.f32 0.0, %v688
        %v690 = vpop.f32.mrf.mxu0
        %v691 = vadd.f32 0.0, %v690
        %692 = vmatmul.bf16.gmra.mxu0 %v600
        %v693 = vpop.f32.mrf.mxu0
        %v694 = vadd.f32 0.0, %v693
        %v695 = vpop.f32.mrf.mxu0
        %v696 = vadd.f32 0.0, %v695
        %697 = vdwg.mxu0
        %v698 = vrcp.pop %v562
        %v699 = vrcp.pop %v564
        %v700 = vrcp.pop %v566
        %v701 = vrcp.pop %v568
        %v702 = vrcp.pop %v570
        %v703 = vrcp.pop %v572
        %v704 = vrcp.pop %v574
        %v705 = vrcp.pop %v576
        %v706 = vrcp.pop %v578
        %v707 = vrcp.pop %v580
        %v708 = vrcp.pop %v582
        %v709 = vrcp.pop %v584
        %v710 = vrcp.pop %v586
        %v711 = vrcp.pop %v588
        %v712 = vrcp.pop %v590
        %v713 = vrcp.pop %v592
        %v714 = vmul.f32 %v659, %v698
        %v715 = vmul.f32 %v661, %v699
        %v716 = vmul.f32 %v664, %v700
        %v717 = vmul.f32 %v666, %v701
        %v718 = vmul.f32 %v669, %v702
        %v719 = vmul.f32 %v671, %v703
        %v720 = vmul.f32 %v674, %v704
        %v721 = vmul.f32 %v676, %v705
        %v722 = vmul.f32 %v679, %v706
        %v723 = vmul.f32 %v681, %v707
        %v724 = vmul.f32 %v684, %v708
        %v725 = vmul.f32 %v686, %v709
        %v726 = vmul.f32 %v689, %v710
        %v727 = vmul.f32 %v691, %v711
        %v728 = vmul.f32 %v694, %v712
        %v729 = vmul.f32 %v696, %v713
        %v730 = vlaneseq
        %v731 = vand.u32 %v730, 127
        %vm732 = vcmp.eq.f32.partialorder %v442, %v482
        %vm733 = vcmp.eq.f32.partialorder %v444, %v484
        %vm734 = vcmp.eq.f32.partialorder %v447, %v486
        %vm735 = vcmp.eq.f32.partialorder %v449, %v488
        %vm736 = vcmp.eq.f32.partialorder %v452, %v490
        %vm737 = vcmp.eq.f32.partialorder %v454, %v492
        %vm738 = vcmp.eq.f32.partialorder %v457, %v494
        %vm739 = vcmp.eq.f32.partialorder %v459, %v496
        %vm740 = vcmp.eq.f32.partialorder %v462, %v498
        %vm741 = vcmp.eq.f32.partialorder %v464, %v500
        %vm742 = vcmp.eq.f32.partialorder %v467, %v502
        %vm743 = vcmp.eq.f32.partialorder %v469, %v504
        %vm744 = vcmp.eq.f32.partialorder %v472, %v506
        %vm745 = vcmp.eq.f32.partialorder %v474, %v508
        %vm746 = vcmp.eq.f32.partialorder %v477, %v510
        %vm747 = vcmp.eq.f32.partialorder %v479, %v512
        %v748 = vsel %vm732, %v731, 128
        %v749 = vsel %vm733, %v731, 128
        %v750 = vsel %vm734, %v731, 128
        %v751 = vsel %vm735, %v731, 128
        %v752 = vsel %vm736, %v731, 128
        %v753 = vsel %vm737, %v731, 128
        %v754 = vsel %vm738, %v731, 128
        %v755 = vsel %vm739, %v731, 128
        %v756 = vsel %vm740, %v731, 128
        %v757 = vsel %vm741, %v731, 128
        %v758 = vsel %vm742, %v731, 128
        %v759 = vsel %vm743, %v731, 128
        %v760 = vsel %vm744, %v731, 128
        %v761 = vsel %vm745, %v731, 128
        %v762 = vsel %vm746, %v731, 128
        %v763 = vsel %vm747, %v731, 128
        %v764 = vand.u32 %v748, 65535
        %v765 = vshra.s32 %v748, 16
        %v766 = vcvt.s32.f32 %v764
        %v767 = vcvt.s32.f32 %v765
        %768 = vmin.xlane.f32.xlu0 %v767
        %v769 = vpop.xlane.xlu0 %768
        %vm770 = vcmp.eq.f32.partialorder %v767, %v769
        %v771 = vsel %vm770, %v766, inf
        %772 = vmin.xlane.f32.xlu0 %v771
        %v773 = vpop.xlane.xlu0 %772
        %v774 = vcvt.f32.s32 %v773
        %v775 = vcvt.f32.s32 %v769
        %v776 = vshll.u32 %v775, 16
        %v777 = vadd.s32 %v776, %v774
        %v778 = vand.u32 %v749, 65535
        %v779 = vshra.s32 %v749, 16
        %v780 = vcvt.s32.f32 %v778
        %v781 = vcvt.s32.f32 %v779
        %782 = vmin.xlane.f32.xlu0 %v781
        %v783 = vpop.xlane.xlu0 %782
        %vm784 = vcmp.eq.f32.partialorder %v781, %v783
        %v785 = vsel %vm784, %v780, inf
        %786 = vmin.xlane.f32.xlu0 %v785
        %v787 = vpop.xlane.xlu0 %786
        %v788 = vcvt.f32.s32 %v787
        %v789 = vcvt.f32.s32 %v783
        %v790 = vshll.u32 %v789, 16
        %v791 = vadd.s32 %v790, %v788
        %v792 = vand.u32 %v750, 65535
        %v793 = vshra.s32 %v750, 16
        %v794 = vcvt.s32.f32 %v792
        %v795 = vcvt.s32.f32 %v793
        %796 = vmin.xlane.f32.xlu0 %v795
        %v797 = vpop.xlane.xlu0 %796
        %vm798 = vcmp.eq.f32.partialorder %v795, %v797
        %v799 = vsel %vm798, %v794, inf
        %800 = vmin.xlane.f32.xlu0 %v799
        %v801 = vpop.xlane.xlu0 %800
        %v802 = vcvt.f32.s32 %v801
        %v803 = vcvt.f32.s32 %v797
        %v804 = vshll.u32 %v803, 16
        %v805 = vadd.s32 %v804, %v802
        %v806 = vand.u32 %v751, 65535
        %v807 = vshra.s32 %v751, 16
        %v808 = vcvt.s32.f32 %v806
        %v809 = vcvt.s32.f32 %v807
        %810 = vmin.xlane.f32.xlu0 %v809
        %v811 = vpop.xlane.xlu0 %810
        %vm812 = vcmp.eq.f32.partialorder %v809, %v811
        %v813 = vsel %vm812, %v808, inf
        %814 = vmin.xlane.f32.xlu0 %v813
        %v815 = vpop.xlane.xlu0 %814
        %v816 = vcvt.f32.s32 %v815
        %v817 = vcvt.f32.s32 %v811
        %v818 = vshll.u32 %v817, 16
        %v819 = vadd.s32 %v818, %v816
        %v820 = vand.u32 %v752, 65535
        %v821 = vshra.s32 %v752, 16
        %v822 = vcvt.s32.f32 %v820
        %v823 = vcvt.s32.f32 %v821
        %824 = vmin.xlane.f32.xlu0 %v823
        %v825 = vpop.xlane.xlu0 %824
        %vm826 = vcmp.eq.f32.partialorder %v823, %v825
        %v827 = vsel %vm826, %v822, inf
        %828 = vmin.xlane.f32.xlu0 %v827
        %v829 = vpop.xlane.xlu0 %828
        %v830 = vcvt.f32.s32 %v829
        %v831 = vcvt.f32.s32 %v825
        %v832 = vshll.u32 %v831, 16
        %v833 = vadd.s32 %v832, %v830
        %v834 = vand.u32 %v753, 65535
        %v835 = vshra.s32 %v753, 16
        %v836 = vcvt.s32.f32 %v834
        %v837 = vcvt.s32.f32 %v835
        %838 = vmin.xlane.f32.xlu0 %v837
        %v839 = vpop.xlane.xlu0 %838
        %vm840 = vcmp.eq.f32.partialorder %v837, %v839
        %v841 = vsel %vm840, %v836, inf
        %842 = vmin.xlane.f32.xlu0 %v841
        %v843 = vpop.xlane.xlu0 %842
        %v844 = vcvt.f32.s32 %v843
        %v845 = vcvt.f32.s32 %v839
        %v846 = vshll.u32 %v845, 16
        %v847 = vadd.s32 %v846, %v844
        %v848 = vand.u32 %v754, 65535
        %v849 = vshra.s32 %v754, 16
        %v850 = vcvt.s32.f32 %v848
        %v851 = vcvt.s32.f32 %v849
        %852 = vmin.xlane.f32.xlu0 %v851
        %v853 = vpop.xlane.xlu0 %852
        %vm854 = vcmp.eq.f32.partialorder %v851, %v853
        %v855 = vsel %vm854, %v850, inf
        %856 = vmin.xlane.f32.xlu0 %v855
        %v857 = vpop.xlane.xlu0 %856
        %v858 = vcvt.f32.s32 %v857
        %v859 = vcvt.f32.s32 %v853
        %v860 = vshll.u32 %v859, 16
        %v861 = vadd.s32 %v860, %v858
        %v862 = vand.u32 %v755, 65535
        %v863 = vshra.s32 %v755, 16
        %v864 = vcvt.s32.f32 %v862
        %v865 = vcvt.s32.f32 %v863
        %866 = vmin.xlane.f32.xlu0 %v865
        %v867 = vpop.xlane.xlu0 %866
        %vm868 = vcmp.eq.f32.partialorder %v865, %v867
        %v869 = vsel %vm868, %v864, inf
        %870 = vmin.xlane.f32.xlu0 %v869
        %v871 = vpop.xlane.xlu0 %870
        %v872 = vcvt.f32.s32 %v871
        %v873 = vcvt.f32.s32 %v867
        %v874 = vshll.u32 %v873, 16
        %v875 = vadd.s32 %v874, %v872
        %v876 = vand.u32 %v756, 65535
        %v877 = vshra.s32 %v756, 16
        %v878 = vcvt.s32.f32 %v876
        %v879 = vcvt.s32.f32 %v877
        %880 = vmin.xlane.f32.xlu0 %v879
        %v881 = vpop.xlane.xlu0 %880
        %vm882 = vcmp.eq.f32.partialorder %v879, %v881
        %v883 = vsel %vm882, %v878, inf
        %884 = vmin.xlane.f32.xlu0 %v883
        %v885 = vpop.xlane.xlu0 %884
        %v886 = vcvt.f32.s32 %v885
        %v887 = vcvt.f32.s32 %v881
        %v888 = vshll.u32 %v887, 16
        %v889 = vadd.s32 %v888, %v886
        %v890 = vand.u32 %v757, 65535
        %v891 = vshra.s32 %v757, 16
        %v892 = vcvt.s32.f32 %v890
        %v893 = vcvt.s32.f32 %v891
        %894 = vmin.xlane.f32.xlu0 %v893
        %v895 = vpop.xlane.xlu0 %894
        %vm896 = vcmp.eq.f32.partialorder %v893, %v895
        %v897 = vsel %vm896, %v892, inf
        %898 = vmin.xlane.f32.xlu0 %v897
        %v899 = vpop.xlane.xlu0 %898
        %v900 = vcvt.f32.s32 %v899
        %v901 = vcvt.f32.s32 %v895
        %v902 = vshll.u32 %v901, 16
        %v903 = vadd.s32 %v902, %v900
        %v904 = vand.u32 %v758, 65535
        %v905 = vshra.s32 %v758, 16
        %v906 = vcvt.s32.f32 %v904
        %v907 = vcvt.s32.f32 %v905
        %908 = vmin.xlane.f32.xlu0 %v907
        %v909 = vpop.xlane.xlu0 %908
        %vm910 = vcmp.eq.f32.partialorder %v907, %v909
        %v911 = vsel %vm910, %v906, inf
        %912 = vmin.xlane.f32.xlu0 %v911
        %v913 = vpop.xlane.xlu0 %912
        %v914 = vcvt.f32.s32 %v913
        %v915 = vcvt.f32.s32 %v909
        %v916 = vshll.u32 %v915, 16
        %v917 = vadd.s32 %v916, %v914
        %v918 = vand.u32 %v759, 65535
        %v919 = vshra.s32 %v759, 16
        %v920 = vcvt.s32.f32 %v918
        %v921 = vcvt.s32.f32 %v919
        %922 = vmin.xlane.f32.xlu0 %v921
        %v923 = vpop.xlane.xlu0 %922
        %vm924 = vcmp.eq.f32.partialorder %v921, %v923
        %v925 = vsel %vm924, %v920, inf
        %926 = vmin.xlane.f32.xlu0 %v925
        %v927 = vpop.xlane.xlu0 %926
        %v928 = vcvt.f32.s32 %v927
        %v929 = vcvt.f32.s32 %v923
        %v930 = vshll.u32 %v929, 16
        %v931 = vadd.s32 %v930, %v928
        %v932 = vand.u32 %v760, 65535
        %v933 = vshra.s32 %v760, 16
        %v934 = vcvt.s32.f32 %v932
        %v935 = vcvt.s32.f32 %v933
        %936 = vmin.xlane.f32.xlu0 %v935
        %v937 = vpop.xlane.xlu0 %936
        %vm938 = vcmp.eq.f32.partialorder %v935, %v937
        %v939 = vsel %vm938, %v934, inf
        %940 = vmin.xlane.f32.xlu0 %v939
        %v941 = vpop.xlane.xlu0 %940
        %v942 = vcvt.f32.s32 %v941
        %v943 = vcvt.f32.s32 %v937
        %v944 = vshll.u32 %v943, 16
        %v945 = vadd.s32 %v944, %v942
        %v946 = vand.u32 %v761, 65535
        %v947 = vshra.s32 %v761, 16
        %v948 = vcvt.s32.f32 %v946
        %v949 = vcvt.s32.f32 %v947
        %950 = vmin.xlane.f32.xlu0 %v949
        %v951 = vpop.xlane.xlu0 %950
        %vm952 = vcmp.eq.f32.partialorder %v949, %v951
        %v953 = vsel %vm952, %v948, inf
        %954 = vmin.xlane.f32.xlu0 %v953
        %v955 = vpop.xlane.xlu0 %954
        %v956 = vcvt.f32.s32 %v955
        %v957 = vcvt.f32.s32 %v951
        %v958 = vshll.u32 %v957, 16
        %v959 = vadd.s32 %v958, %v956
        %v960 = vand.u32 %v762, 65535
        %v961 = vshra.s32 %v762, 16
        %v962 = vcvt.s32.f32 %v960
        %v963 = vcvt.s32.f32 %v961
        %964 = vmin.xlane.f32.xlu0 %v963
        %v965 = vpop.xlane.xlu0 %964
        %vm966 = vcmp.eq.f32.partialorder %v963, %v965
        %v967 = vsel %vm966, %v962, inf
        %968 = vmin.xlane.f32.xlu0 %v967
        %v969 = vpop.xlane.xlu0 %968
        %v970 = vcvt.f32.s32 %v969
        %v971 = vcvt.f32.s32 %v965
        %v972 = vshll.u32 %v971, 16
        %v973 = vadd.s32 %v972, %v970
        %v974 = vand.u32 %v763, 65535
        %v975 = vshra.s32 %v763, 16
        %v976 = vcvt.s32.f32 %v974
        %v977 = vcvt.s32.f32 %v975
        %978 = vmin.xlane.f32.xlu0 %v977
        %v979 = vpop.xlane.xlu0 %978
        %vm980 = vcmp.eq.f32.partialorder %v977, %v979
        %v981 = vsel %vm980, %v976, inf
        %982 = vmin.xlane.f32.xlu0 %v981
        %v983 = vpop.xlane.xlu0 %982
        %v984 = vcvt.f32.s32 %v983
        %v985 = vcvt.f32.s32 %v979
        %v986 = vshll.u32 %v985, 16
        %v987 = vadd.s32 %v986, %v984
        %v988 = vcvt.s32.f32 %v777
        %v989 = vcvt.s32.f32 %v791
        %v990 = vcvt.s32.f32 %v805
        %v991 = vcvt.s32.f32 %v819
        %v992 = vcvt.s32.f32 %v833
        %v993 = vcvt.s32.f32 %v847
        %v994 = vcvt.s32.f32 %v861
        %v995 = vcvt.s32.f32 %v875
        %v996 = vcvt.s32.f32 %v889
        %v997 = vcvt.s32.f32 %v903
        %v998 = vcvt.s32.f32 %v917
        %v999 = vcvt.s32.f32 %v931
        %v1000 = vcvt.s32.f32 %v945
        %v1001 = vcvt.s32.f32 %v959
        %v1002 = vcvt.s32.f32 %v973
        %v1003 = vcvt.s32.f32 %v987
        %v1004 = vsub.f32 %v714, %v296
        %v1005 = vsub.f32 %v715, %v297
        %v1006 = vsub.f32 %v716, %v298
        %v1007 = vsub.f32 %v717, %v299
        %v1008 = vsub.f32 %v718, %v300
        %v1009 = vsub.f32 %v719, %v301
        %v1010 = vsub.f32 %v720, %v302
        %v1011 = vsub.f32 %v721, %v303
        %v1012 = vsub.f32 %v722, %v304
        %v1013 = vsub.f32 %v723, %v305
        %v1014 = vsub.f32 %v724, %v306
        %v1015 = vsub.f32 %v725, %v307
        %v1016 = vsub.f32 %v726, %v308
        %v1017 = vsub.f32 %v727, %v309
        %v1018 = vsub.f32 %v728, %v310
        %v1019 = vsub.f32 %v729, %v311
        %v1020 = vand.u32 2147483647, %v1004
        %v1021 = vand.u32 2147483647, %v1005
        %v1022 = vand.u32 2147483647, %v1006
        %v1023 = vand.u32 2147483647, %v1007
        %v1024 = vand.u32 2147483647, %v1008
        %v1025 = vand.u32 2147483647, %v1009
        %v1026 = vand.u32 2147483647, %v1010
        %v1027 = vand.u32 2147483647, %v1011
        %v1028 = vand.u32 2147483647, %v1012
        %v1029 = vand.u32 2147483647, %v1013
        %v1030 = vand.u32 2147483647, %v1014
        %v1031 = vand.u32 2147483647, %v1015
        %v1032 = vand.u32 2147483647, %v1016
        %v1033 = vand.u32 2147483647, %v1017
        %v1034 = vand.u32 2147483647, %v1018
        %v1035 = vand.u32 2147483647, %v1019
        %1036 = vadd.xlane.f32.xlu0 %v1020
        %v1037 = vpop.xlane.xlu0 %1036
        %1038 = vadd.xlane.f32.xlu0 %v1021
        %v1039 = vpop.xlane.xlu0 %1038
        %1040 = vadd.xlane.f32.xlu0 %v1022
        %v1041 = vpop.xlane.xlu0 %1040
        %1042 = vadd.xlane.f32.xlu0 %v1023
        %v1043 = vpop.xlane.xlu0 %1042
        %1044 = vadd.xlane.f32.xlu0 %v1024
        %v1045 = vpop.xlane.xlu0 %1044
        %1046 = vadd.xlane.f32.xlu0 %v1025
        %v1047 = vpop.xlane.xlu0 %1046
        %1048 = vadd.xlane.f32.xlu0 %v1026
        %v1049 = vpop.xlane.xlu0 %1048
        %1050 = vadd.xlane.f32.xlu0 %v1027
        %v1051 = vpop.xlane.xlu0 %1050
        %1052 = vadd.xlane.f32.xlu0 %v1028
        %v1053 = vpop.xlane.xlu0 %1052
        %1054 = vadd.xlane.f32.xlu0 %v1029
        %v1055 = vpop.xlane.xlu0 %1054
        %1056 = vadd.xlane.f32.xlu0 %v1030
        %v1057 = vpop.xlane.xlu0 %1056
        %1058 = vadd.xlane.f32.xlu0 %v1031
        %v1059 = vpop.xlane.xlu0 %1058
        %1060 = vadd.xlane.f32.xlu0 %v1032
        %v1061 = vpop.xlane.xlu0 %1060
        %1062 = vadd.xlane.f32.xlu0 %v1033
        %v1063 = vpop.xlane.xlu0 %1062
        %1064 = vadd.xlane.f32.xlu0 %v1034
        %v1065 = vpop.xlane.xlu0 %1064
        %1066 = vadd.xlane.f32.xlu0 %v1035
        %v1067 = vpop.xlane.xlu0 %1066
        %vm1068 = vcmp.eq.s32.totalorder %v731, 32
        %v1069 = vsel %vm1068, %v988, %v714
        %v1070 = vsel %vm1068, %v989, %v715
        %v1071 = vsel %vm1068, %v990, %v716
        %v1072 = vsel %vm1068, %v991, %v717
        %v1073 = vsel %vm1068, %v992, %v718
        %v1074 = vsel %vm1068, %v993, %v719
        %v1075 = vsel %vm1068, %v994, %v720
        %v1076 = vsel %vm1068, %v995, %v721
        %v1077 = vsel %vm1068, %v996, %v722
        %v1078 = vsel %vm1068, %v997, %v723
        %v1079 = vsel %vm1068, %v998, %v724
        %v1080 = vsel %vm1068, %v999, %v725
        %v1081 = vsel %vm1068, %v1000, %v726
        %v1082 = vsel %vm1068, %v1001, %v727
        %v1083 = vsel %vm1068, %v1002, %v728
        %v1084 = vsel %vm1068, %v1003, %v729
        %vm1085 = vcmp.eq.s32.totalorder %v731, 33
        %v1086 = vsel %vm1085, %v1037, %v1069
        %v1087 = vsel %vm1085, %v1039, %v1070
        %v1088 = vsel %vm1085, %v1041, %v1071
        %v1089 = vsel %vm1085, %v1043, %v1072
        %v1090 = vsel %vm1085, %v1045, %v1073
        %v1091 = vsel %vm1085, %v1047, %v1074
        %v1092 = vsel %vm1085, %v1049, %v1075
        %v1093 = vsel %vm1085, %v1051, %v1076
        %v1094 = vsel %vm1085, %v1053, %v1077
        %v1095 = vsel %vm1085, %v1055, %v1078
        %v1096 = vsel %vm1085, %v1057, %v1079
        %v1097 = vsel %vm1085, %v1059, %v1080
        %v1098 = vsel %vm1085, %v1061, %v1081
        %v1099 = vsel %vm1085, %v1063, %v1082
        %v1100 = vsel %vm1085, %v1065, %v1083
        %v1101 = vsel %vm1085, %v1067, %v1084
        %1102 = vst [vmem:[%s292] sm:$0xff] %v1086
        %1103 = vst [vmem:[%s292 + $0x8] sm:$0xff] %v1087
        %1104 = vst [vmem:[%s292 + $0x10] sm:$0xff] %v1088
        %1105 = vst [vmem:[%s292 + $0x18] sm:$0xff] %v1089
        %1106 = vst [vmem:[%s292 + $0x20] sm:$0xff] %v1090
        %1107 = vst [vmem:[%s292 + $0x28] sm:$0xff] %v1091
        %1108 = vst [vmem:[%s292 + $0x30] sm:$0xff] %v1092
        %1109 = vst [vmem:[%s292 + $0x38] sm:$0xff] %v1093
        %1110 = vst [vmem:[%s292 + $0x40] sm:$0xff] %v1094
        %1111 = vst [vmem:[%s292 + $0x48] sm:$0xff] %v1095
        %1112 = vst [vmem:[%s292 + $0x50] sm:$0xff] %v1096
        %1113 = vst [vmem:[%s292 + $0x58] sm:$0xff] %v1097
        %1114 = vst [vmem:[%s292 + $0x60] sm:$0xff] %v1098
        %1115 = vst [vmem:[%s292 + $0x68] sm:$0xff] %v1099
        %1116 = vst [vmem:[%s292 + $0x70] sm:$0xff] %v1100
        %1117 = vst [vmem:[%s292 + $0x78] sm:$0xff] %v1101
        %s1118 = sand.u32 %s127, 1
        %s1119 = scalar_lea.sflag [#allocation4], %s1118
        %s1120 = sand.u32 %s127, 1
        %s1121 = smul.addr %s1120, 128
        %s1122 = scalar_lea.vmem [#allocation10], %s1121
        // Predicated region
        $region53: #{tpu_custom_call.1} parent=35 // pred_check
          %p1123 = pneg %p137
        $region54: #{tpu_custom_call.1} parent=35 // pred_check_branch
          %1125 = sbr.rel (%p1123) target = $region56
        $region55: #{tpu_custom_call.1} parent=35 // pred_region
          %s1126 = smul.u32 16, %s25
          %1128 = vsyncadd %s1119, 0
          %s1129 = smul.addr %s1126, 8
          %s1130 = scalar_lea.hbm %s4, %s1129
          %s1131 = sshll.u32 %s1122, 4
          %s1132 = int_to_ptr.vmem [resolvable:$true] %s1131
          %s1133 = sshll.u32 %s1130, 4
          %s1134 = int_to_ptr.hbm [resolvable:$true] %s1133
          %1139 = dma.vmem_to_hbm [thread:$0]  %s1132, 2048, %s1134, %s1119, 128, 128, 8
        $region56: #{tpu_custom_call.1} parent=35 // pred_fallthru
          _
      $region36: #{tpu_custom_call.1} parent=5 // pred_fallthru
        _
      %p1140 = scmp.le.s32.totalorder 2, %s20
      // Predicated region
      $region57: #{tpu_custom_call.1} parent=5 // pred_check
        %p1141 = pneg %p1140
      $region58: #{tpu_custom_call.1} parent=5 // pred_check_branch
        %1143 = sbr.rel (%p1141) target = $region60
      $region59: #{tpu_custom_call.1} parent=5 // pred_region
        %s1144 = ssub.s32 %s20, 2
        // Predicated region
        $region61: #{tpu_custom_call.1} parent=59 // pred_check
          %p1145 = pneg %p143
        $region62: #{tpu_custom_call.1} parent=59 // pred_check_branch
          %1147 = sbr.rel (%p1145) target = $region64
        $region63: #{tpu_custom_call.1} parent=59 // pred_region
          %s1148 = sand.u32 %s128, 1
          %s1149 = scalar_lea.sflag [#allocation4], %s1148
          %s1150 = sand.u32 %s128, 1
          %s1151 = smul.addr %s1150, 128
          %s1152 = scalar_lea.vmem [#allocation10], %s1151
          %1154 = dma.done %s1149, 2048
        $region64: #{tpu_custom_call.1} parent=59 // pred_fallthru
          _
      $region60: #{tpu_custom_call.1} parent=5 // pred_fallthru
        _
    $region6: #{tpu_custom_call.1} parent=1 // loop_footer
      %s24 = sadd.s32 1, %s20
    $region7: #{tpu_custom_call.1} parent=1 // loop_footer_branch
      %19 = sbr.rel target = $region3
    $region8: #{tpu_custom_call.1} parent=1 // loop_exit
      _
    %1155 = vsyncpa [#allocation3], 1
    %s1156 = scalar_lea.sflag [#allocation3], 1
    %1157 = vsyncpa %s1156, 1
    %1158 = vsyncpa [#allocation6], 1
    %1159 = vsyncpa [#allocation9], 1
    %s1160 = scalar_lea.sflag [#allocation9], 1
    %1161 = vsyncpa %s1160, 1
    %1162 = vsyncpa [#allocation4], 1
    %s1163 = scalar_lea.sflag [#allocation4], 1
    %1164 = vsyncpa %s1163, 1

// kernel: tpu_custom_call.1
$region0: #{tpu_custom_call.1}
  #allocation0 [shape = 'u32[]', space=smem, size = 0x4, offset = 0x4, fixed_abs, tag = 'smem constant byte address 0x4 - core index']
  #allocation1 [shape = 'u32[72,128]{1,0:T(1,128)}', space=vmem, size = 0x9000, scoped, tag = 'internal scratch']
  %s0 = inlined_call_operand.hbm [shape: f32[384,128], index: 0, kind: input, shape index: {}]
  %s1 = inlined_call_operand.hbm [shape: bf16[128,128], index: 1, kind: input, shape index: {}]
  %s2 = inlined_call_operand.hbm [shape: bf16[128,128], index: 2, kind: input, shape index: {}]
  %s3 = inlined_call_operand.hbm [shape: bf16[384,128], index: 3, kind: input, shape index: {}]
  %s4 = inlined_call_operand.hbm [shape: f32[384,128], index: 4, kind: output, shape index: {}]
  %s5 = sld [smem:[#allocation0]]
  $region65: #{tpu_custom_call.1} parent=0
    _
  %s7 = ssub.s32 1, %s5
  %s8 = scalar_select 0, %s7, %s5
  $region1: #{tpu_custom_call.1} parent=0
    #allocation2 [shape = 'u8[131072]{0}', space=vmem, size = 0x20000, scoped, tag = 'input window, operand 0']
    #allocation3 [shape = 's32[2]{0}', space=sflag, size = 0x8, scoped, tag = 'scoped memory for tpu_custom_call.1']
    #allocation4 [shape = 's32[2]{0}', space=sflag, size = 0x8, scoped, tag = 'scoped memory for tpu_custom_call.1']
    #allocation5 [shape = 'u8[32768]{0}', space=vmem, size = 0x8000, scoped, tag = 'input window, operand 1, single buffered']
    #allocation6 [shape = 's32[1]{0}', space=sflag, size = 0x4, scoped, tag = 'scoped memory for tpu_custom_call.1']
    #allocation7 [shape = 'u8[32768]{0}', space=vmem, size = 0x8000, scoped, tag = 'input window, operand 2, single buffered']
    #allocation8 [shape = 'u8[65536]{0}', space=vmem, size = 0x10000, scoped, tag = 'input window, operand 3']
    #allocation9 [shape = 's32[2]{0}', space=sflag, size = 0x8, scoped, tag = 'scoped memory for tpu_custom_call.1']
    #allocation10 [shape = 'u8[131072]{0}', space=vmem, size = 0x20000, scoped, tag = 'output window, operand 0']
    %9 = vsyncpa [#allocation3], 0
    %s10 = scalar_lea.sflag [#allocation3], 1
    %11 = vsyncpa %s10, 0
    %12 = vsyncpa [#allocation6], 0
    %13 = vsyncpa [#allocation9], 0
    %s14 = scalar_lea.sflag [#allocation9], 1
    %15 = vsyncpa %s14, 0
    %16 = vsyncpa [#allocation4], 0
    %s17 = scalar_lea.sflag [#allocation4], 1
    %18 = vsyncpa %s17, 0
    loop: start=0, step=1, limit=5
    $region2: #{tpu_custom_call.1} parent=1 // loop_pre_header
      _
    $region3: #{tpu_custom_call.1} parent=1 // loop_header
      %s20 = sphi 0, %s24
      %p21 = scmp.ge.s32.totalorder %s20, 5
      %s30 = sphi 0, %s32
      %s33 = sphi 0, %s30
      %s34 = sphi 0, %s33
      %s50 = sphi 0, %s34
      %s54 = sphi 0, %s54
      %s56 = sphi 0, %s54
      %s57 = sphi 0, %s56
      %s71 = sphi 0, %s57
      %s75 = sphi 0, %s75
      %s77 = sphi 0, %s75
      %s78 = sphi 0, %s77
      %s92 = sphi 0, %s78
      %s98 = sphi 0, %s100
      %s101 = sphi 0, %s98
      %s102 = sphi 0, %s101
      %s118 = sphi 0, %s102
      %s124 = sphi 0, %s126
      %s127 = sphi 0, %s124
      %s128 = sphi 0, %s127
      %s144 = sphi 0, %s128
    $region4: #{tpu_custom_call.1} parent=1 // loop_header_branch
      %23 = sbr.rel (%p21) target = $region8
    $region5: #{tpu_custom_call.1} parent=1 // loop_body
      %s25 = ssub.s32 %s20, 1
      %s26 = ssub.s32 %s20, 2
      %s27 = sadd.s32 %s20, 1
      %s28 = ssub.s32 %s20, %s27
      %p29 = scmp.eq.s32.totalorder %s28, 0
      %s31 = sadd.s32 %s30, 1
      %s32 = scalar_select %p29, %s30, %s31
      %p35 = pneg %p29
      %p36 = scmp.eq.s32.totalorder %s20, 2
      %p37 = por %p35, %p36
      %p38 = scmp.ne.s32.totalorder %s30, %s33
      %p39 = scmp.eq.s32.totalorder %s20, 0
      %p40 = por %p38, %p39
      %p41 = scmp.ne.s32.totalorder %s30, %s33
      %p42 = scmp.eq.s32.totalorder %s25, 2
      %p43 = por %p41, %p42
      %p44 = scmp.ne.s32.totalorder %s33, %s34
      %p45 = scmp.eq.s32.totalorder %s25, 0
      %p46 = por %p44, %p45
      %p47 = scmp.ne.s32.totalorder %s33, %s34
      %p48 = scmp.eq.s32.totalorder %s26, 2
      %p49 = por %p47, %p48
      %p51 = scmp.ne.s32.totalorder %s34, %s50
      %p52 = scmp.eq.s32.totalorder %s26, 0
      %p53 = por %p51, %p52
      %s55 = sadd.s32 %s54, 1
      %p58 = scmp.eq.s32.totalorder %s20, 2
      %p59 = scmp.ne.s32.totalorder %s54, %s56
      %p60 = scmp.eq.s32.totalorder %s20, 0
      %p61 = por %p59, %p60
      %p62 = scmp.ne.s32.totalorder %s54, %s56
      %p63 = scmp.eq.s32.totalorder %s25, 2
      %p64 = por %p62, %p63
      %p65 = scmp.ne.s32.totalorder %s56, %s57
      %p66 = scmp.eq.s32.totalorder %s25, 0
      %p67 = por %p65, %p66
      %p68 = scmp.ne.s32.totalorder %s56, %s57
      %p69 = scmp.eq.s32.totalorder %s26, 2
      %p70 = por %p68, %p69
      %p72 = scmp.ne.s32.totalorder %s57, %s71
      %p73 = scmp.eq.s32.totalorder %s26, 0
      %p74 = por %p72, %p73
      %s76 = sadd.s32 %s75, 1
      %p79 = scmp.eq.s32.totalorder %s20, 2
      %p80 = scmp.ne.s32.totalorder %s75, %s77
      %p81 = scmp.eq.s32.totalorder %s20, 0
      %p82 = por %p80, %p81
      %p83 = scmp.ne.s32.totalorder %s75, %s77
      %p84 = scmp.eq.s32.totalorder %s25, 2
      %p85 = por %p83, %p84
      %p86 = scmp.ne.s32.totalorder %s77, %s78
      %p87 = scmp.eq.s32.totalorder %s25, 0
      %p88 = por %p86, %p87
      %p89 = scmp.ne.s32.totalorder %s77, %s78
      %p90 = scmp.eq.s32.totalorder %s26, 2
      %p91 = por %p89, %p90
      %p93 = scmp.ne.s32.totalorder %s78, %s92
      %p94 = scmp.eq.s32.totalorder %s26, 0
      %p95 = por %p93, %p94
      %s96 = ssub.s32 %s20, %s27
      %p97 = scmp.eq.s32.totalorder %s96, 0
      %s99 = sadd.s32 %s98, 1
      %s100 = scalar_select %p97, %s98, %s99
      %p103 = pneg %p97
      %p104 = scmp.eq.s32.totalorder %s20, 2
      %p105 = por %p103, %p104
      %p106 = scmp.ne.s32.totalorder %s98, %s101
      %p107 = scmp.eq.s32.totalorder %s20, 0
      %p108 = por %p106, %p107
      %p109 = scmp.ne.s32.totalorder %s98, %s101
      %p110 = scmp.eq.s32.totalorder %s25, 2
      %p111 = por %p109, %p110
      %p112 = scmp.ne.s32.totalorder %s101, %s102
      %p113 = scmp.eq.s32.totalorder %s25, 0
      %p114 = por %p112, %p113
      %p115 = scmp.ne.s32.totalorder %s101, %s102
      %p116 = scmp.eq.s32.totalorder %s26, 2
      %p117 = por %p115, %p116
      %p119 = scmp.ne.s32.totalorder %s102, %s118
      %p120 = scmp.eq.s32.totalorder %s26, 0
      %p121 = por %p119, %p120
      %s122 = ssub.s32 %s20, %s27
      %p123 = scmp.eq.s32.totalorder %s122, 0
      %s125 = sadd.s32 %s124, 1
      %s126 = scalar_select %p123, %s124, %s125
      %p129 = pneg %p123
      %p130 = scmp.eq.s32.totalorder %s20, 2
      %p131 = por %p129, %p130
      %p132 = scmp.ne.s32.totalorder %s124, %s127
      %p133 = scmp.eq.s32.totalorder %s20, 0
      %p134 = por %p132, %p133
      %p135 = scmp.ne.s32.totalorder %s124, %s127
      %p136 = scmp.eq.s32.totalorder %s25, 2
      %p137 = por %p135, %p136
      %p138 = scmp.ne.s32.totalorder %s127, %s128
      %p139 = scmp.eq.s32.totalorder %s25, 0
      %p140 = por %p138, %p139
      %p141 = scmp.ne.s32.totalorder %s127, %s128
      %p142 = scmp.eq.s32.totalorder %s26, 2
      %p143 = por %p141, %p142
      %p145 = scmp.ne.s32.totalorder %s128, %s144
      %p146 = scmp.eq.s32.totalorder %s26, 0
      %p147 = por %p145, %p146
      %p148 = scmp.le.s32.totalorder 1, %s20
      %p149 = scmp.lt.s32.totalorder %s20, 4
      %p150 = pnand %p148, %p149
      %p151 = pneg %p150
      // Predicated region
      $region9: #{tpu_custom_call.1} parent=5 // pred_check
        _
      $region10: #{tpu_custom_call.1} parent=5 // pred_check_branch
        %153 = sbr.rel (%p150) target = $region12
      $region11: #{tpu_custom_call.1} parent=5 // pred_region
        %s154 = ssub.s32 %s20, 1
        // Predicated region
        $region13: #{tpu_custom_call.1} parent=11 // pred_check
          %p155 = pneg %p67
        $region14: #{tpu_custom_call.1} parent=11 // pred_check_branch
          %157 = sbr.rel (%p155) target = $region16
        $region15: #{tpu_custom_call.1} parent=11 // pred_region
          %159 = vsyncadd [#allocation6], 0
          %s160 = sshll.u32 %s1, 4
          %s161 = int_to_ptr.hbm [resolvable:$true] %s160
          %s162 = sshll.u32 [#allocation5], 4
          %s163 = int_to_ptr.vmem [resolvable:$true] %s162
          %168 = dma.hbm_to_vmem [thread:$0]  %s161, 1024, %s163, [#allocation6], 64, 64, 4
        $region16: #{tpu_custom_call.1} parent=11 // pred_fallthru
          _
        // Predicated region
        $region17: #{tpu_custom_call.1} parent=11 // pred_check
          %p169 = pneg %p88
        $region18: #{tpu_custom_call.1} parent=11 // pred_check_branch
          %171 = sbr.rel (%p169) target = $region20
        $region19: #{tpu_custom_call.1} parent=11 // pred_region
          %173 = vsyncadd [#allocation6], 0
          %s174 = sshll.u32 %s2, 4
          %s175 = int_to_ptr.hbm [resolvable:$true] %s174
          %s176 = sshll.u32 [#allocation7], 4
          %s177 = int_to_ptr.vmem [resolvable:$true] %s176
          %182 = dma.hbm_to_vmem [thread:$0]  %s175, 1024, %s177, [#allocation6], 64, 64, 4
        $region20: #{tpu_custom_call.1} parent=11 // pred_fallthru
          _
      $region12: #{tpu_custom_call.1} parent=5 // pred_fallthru
        _
      %p183 = scmp.lt.s32.totalorder %s20, 3
      // Predicated region
      $region21: #{tpu_custom_call.1} parent=5 // pred_check
        %p184 = pneg %p183
      $region22: #{tpu_custom_call.1} parent=5 // pred_check_branch
        %186 = sbr.rel (%p184) target = $region24
      $region23: #{tpu_custom_call.1} parent=5 // pred_region
        // Predicated region
        $region25: #{tpu_custom_call.1} parent=23 // pred_check
          %p187 = pneg %p40
        $region26: #{tpu_custom_call.1} parent=23 // pred_check_branch
          %189 = sbr.rel (%p187) target = $region28
        $region27: #{tpu_custom_call.1} parent=23 // pred_region
          %s190 = sand.u32 %s30, 1
          %s191 = scalar_lea.sflag [#allocation3], %s190
          %s192 = sand.u32 %s30, 1
          %s193 = smul.addr %s192, 128
          %s194 = scalar_lea.vmem [#allocation2], %s193
          %s195 = smul.u32 16, %s20
          %197 = vsyncadd %s191, 0
          %s198 = smul.addr %s195, 8
          %s199 = scalar_lea.hbm %s0, %s198
          %s200 = sshll.u32 %s199, 4
          %s201 = int_to_ptr.hbm [resolvable:$true] %s200
          %s202 = sshll.u32 %s194, 4
          %s203 = int_to_ptr.vmem [resolvable:$true] %s202
          %208 = dma.hbm_to_vmem [thread:$0]  %s201, 2048, %s203, %s191, 128, 128, 8
        $region28: #{tpu_custom_call.1} parent=23 // pred_fallthru
          _
        // Predicated region
        $region29: #{tpu_custom_call.1} parent=23 // pred_check
          %p209 = pneg %p108
        $region30: #{tpu_custom_call.1} parent=23 // pred_check_branch
          %211 = sbr.rel (%p209) target = $region32
        $region31: #{tpu_custom_call.1} parent=23 // pred_region
          %s212 = sand.u32 %s98, 1
          %s213 = scalar_lea.sflag [#allocation9], %s212
          %s214 = sand.u32 %s98, 1
          %s215 = smul.addr %s214, 64
          %s216 = scalar_lea.vmem [#allocation8], %s215
          %s217 = smul.u32 16, %s20
          %219 = vsyncadd %s213, 0
          %s220 = smul.addr %s217, 4
          %s221 = scalar_lea.hbm %s3, %s220
          %s222 = sshll.u32 %s221, 4
          %s223 = int_to_ptr.hbm [resolvable:$true] %s222
          %s224 = sshll.u32 %s216, 4
          %s225 = int_to_ptr.vmem [resolvable:$true] %s224
          %230 = dma.hbm_to_vmem [thread:$0]  %s223, 1024, %s225, %s213, 64, 64, 4
        $region32: #{tpu_custom_call.1} parent=23 // pred_fallthru
          _
      $region24: #{tpu_custom_call.1} parent=5 // pred_fallthru
        _
      %p231 = scmp.le.s32.totalorder 1, %s20
      %p232 = scmp.lt.s32.totalorder %s20, 4
      %p233 = pnand %p231, %p232
      %p234 = pneg %p233
      // Predicated region
      $region33: #{tpu_custom_call.1} parent=5 // pred_check
        _
      $region34: #{tpu_custom_call.1} parent=5 // pred_check_branch
        %236 = sbr.rel (%p233) target = $region36
      $region35: #{tpu_custom_call.1} parent=5 // pred_region
        %s237 = ssub.s32 %s20, 1
        %s238 = sand.u32 %s33, 1
        %s239 = scalar_lea.sflag [#allocation3], %s238
        %s240 = sand.u32 %s33, 1
        %s241 = smul.addr %s240, 128
        %s242 = scalar_lea.vmem [#allocation2], %s241
        // Predicated region
        $region37: #{tpu_custom_call.1} parent=35 // pred_check
          %p243 = pneg %p46
        $region38: #{tpu_custom_call.1} parent=35 // pred_check_branch
          %245 = sbr.rel (%p243) target = $region40
        $region39: #{tpu_custom_call.1} parent=35 // pred_region
          %247 = dma.done %s239, 2048
        $region40: #{tpu_custom_call.1} parent=35 // pred_fallthru
          _
        // Predicated region
        $region41: #{tpu_custom_call.1} parent=35 // pred_check
          %p248 = pneg %p67
        $region42: #{tpu_custom_call.1} parent=35 // pred_check_branch
          %250 = sbr.rel (%p248) target = $region44
        $region43: #{tpu_custom_call.1} parent=35 // pred_region
          %252 = dma.done [#allocation6], 1024
        $region44: #{tpu_custom_call.1} parent=35 // pred_fallthru
          _
        // Predicated region
        $region45: #{tpu_custom_call.1} parent=35 // pred_check
          %p253 = pneg %p88
        $region46: #{tpu_custom_call.1} parent=35 // pred_check_branch
          %255 = sbr.rel (%p253) target = $region48
        $region47: #{tpu_custom_call.1} parent=35 // pred_region
          %257 = dma.done [#allocation6], 1024
        $region48: #{tpu_custom_call.1} parent=35 // pred_fallthru
          _
        %s258 = sand.u32 %s101, 1
        %s259 = scalar_lea.sflag [#allocation9], %s258
        %s260 = sand.u32 %s101, 1
        %s261 = smul.addr %s260, 64
        %s262 = scalar_lea.vmem [#allocation8], %s261
        // Predicated region
        $region49: #{tpu_custom_call.1} parent=35 // pred_check
          %p263 = pneg %p114
        $region50: #{tpu_custom_call.1} parent=35 // pred_check_branch
          %265 = sbr.rel (%p263) target = $region52
        $region51: #{tpu_custom_call.1} parent=35 // pred_region
          %267 = dma.done %s259, 1024
        $region52: #{tpu_custom_call.1} parent=35 // pred_fallthru
          _
        %s268 = sand.u32 %s33, 1
        %s269 = scalar_lea.sflag [#allocation3], %s268
        %s270 = sand.u32 %s33, 1
        %s271 = smul.addr %s270, 128
        %s272 = scalar_lea.vmem [#allocation2], %s271
        %p273 = pneg %p46
        %p274 = pneg %p43
        %p275 = pneg %p67
        %p276 = pneg %p64
        %p277 = pneg %p88
        %p278 = pneg %p85
        %s279 = sand.u32 %s101, 1
        %s280 = scalar_lea.sflag [#allocation9], %s279
        %s281 = sand.u32 %s101, 1
        %s282 = smul.addr %s281, 64
        %s283 = scalar_lea.vmem [#allocation8], %s282
        %p284 = pneg %p114
        %p285 = pneg %p111
        %p286 = pneg %p140
        %p287 = pneg %p137
        %s288 = sand.u32 %s127, 1
        %s289 = scalar_lea.sflag [#allocation4], %s288
        %s290 = sand.u32 %s127, 1
        %s291 = smul.addr %s290, 128
        %s292 = scalar_lea.vmem [#allocation10], %s291
        %s293 = smul.u32 16, %s25
        %s294 = smul.u32 16, %s25
        %s295 = smul.u32 16, %s25
        %v296 = vld [vmem:[%s242] sm:$0xff]
        %v297 = vld [vmem:[%s242 + $0x8] sm:$0xff]
        %v298 = vld [vmem:[%s242 + $0x10] sm:$0xff]
        %v299 = vld [vmem:[%s242 + $0x18] sm:$0xff]
        %v300 = vld [vmem:[%s242 + $0x20] sm:$0xff]
        %v301 = vld [vmem:[%s242 + $0x28] sm:$0xff]
        %v302 = vld [vmem:[%s242 + $0x30] sm:$0xff]
        %v303 = vld [vmem:[%s242 + $0x38] sm:$0xff]
        %v304 = vld [vmem:[%s242 + $0x40] sm:$0xff]
        %v305 = vld [vmem:[%s242 + $0x48] sm:$0xff]
        %v306 = vld [vmem:[%s242 + $0x50] sm:$0xff]
        %v307 = vld [vmem:[%s242 + $0x58] sm:$0xff]
        %v308 = vld [vmem:[%s242 + $0x60] sm:$0xff]
        %v309 = vld [vmem:[%s242 + $0x68] sm:$0xff]
        %v310 = vld [vmem:[%s242 + $0x70] sm:$0xff]
        %v311 = vld [vmem:[%s242 + $0x78] sm:$0xff]
        %v312 = vld [vmem:[#allocation5] sm:$0xf]
        %v313 = vld [vmem:[#allocation5 + $0x4] sm:$0xf]
        %v314 = vld [vmem:[#allocation5 + $0x8] sm:$0xf]
        %v315 = vld [vmem:[#allocation5 + $0xc] sm:$0xf]
        %v316 = vld [vmem:[#allocation5 + $0x10] sm:$0xf]
        %v317 = vld [vmem:[#allocation5 + $0x14] sm:$0xf]
        %v318 = vld [vmem:[#allocation5 + $0x18] sm:$0xf]
        %v319 = vld [vmem:[#allocation5 + $0x1c] sm:$0xf]
        %v320 = vld [vmem:[#allocation5 + $0x20] sm:$0xf]
        %v321 = vld [vmem:[#allocation5 + $0x24] sm:$0xf]
        %v322 = vld [vmem:[#allocation5 + $0x28] sm:$0xf]
        %v323 = vld [vmem:[#allocation5 + $0x2c] sm:$0xf]
        %v324 = vld [vmem:[#allocation5 + $0x30] sm:$0xf]
        %v325 = vld [vmem:[#allocation5 + $0x34] sm:$0xf]
        %v326 = vld [vmem:[#allocation5 + $0x38] sm:$0xf]
        %v327 = vld [vmem:[#allocation5 + $0x3c] sm:$0xf]
        %v328 = vld [vmem:[#allocation7] sm:$0xf]
        %v329 = vld [vmem:[#allocation7 + $0x4] sm:$0xf]
        %v330 = vld [vmem:[#allocation7 + $0x8] sm:$0xf]
        %v331 = vld [vmem:[#allocation7 + $0xc] sm:$0xf]
        %v332 = vld [vmem:[#allocation7 + $0x10] sm:$0xf]
        %v333 = vld [vmem:[#allocation7 + $0x14] sm:$0xf]
        %v334 = vld [vmem:[#allocation7 + $0x18] sm:$0xf]
        %v335 = vld [vmem:[#allocation7 + $0x1c] sm:$0xf]
        %v336 = vld [vmem:[#allocation7 + $0x20] sm:$0xf]
        %v337 = vld [vmem:[#allocation7 + $0x24] sm:$0xf]
        %v338 = vld [vmem:[#allocation7 + $0x28] sm:$0xf]
        %v339 = vld [vmem:[#allocation7 + $0x2c] sm:$0xf]
        %v340 = vld [vmem:[#allocation7 + $0x30] sm:$0xf]
        %v341 = vld [vmem:[#allocation7 + $0x34] sm:$0xf]
        %v342 = vld [vmem:[#allocation7 + $0x38] sm:$0xf]
        %v343 = vld [vmem:[#allocation7 + $0x3c] sm:$0xf]
        %v344 = vld [vmem:[%s262] sm:$0xf]
        %v345 = vld [vmem:[%s262 + $0x4] sm:$0xf]
        %v346 = vld [vmem:[%s262 + $0x8] sm:$0xf]
        %v347 = vld [vmem:[%s262 + $0xc] sm:$0xf]
        %v348 = vld [vmem:[%s262 + $0x10] sm:$0xf]
        %v349 = vld [vmem:[%s262 + $0x14] sm:$0xf]
        %v350 = vld [vmem:[%s262 + $0x18] sm:$0xf]
        %v351 = vld [vmem:[%s262 + $0x1c] sm:$0xf]
        %v352 = vld [vmem:[%s262 + $0x20] sm:$0xf]
        %v353 = vld [vmem:[%s262 + $0x24] sm:$0xf]
        %v354 = vld [vmem:[%s262 + $0x28] sm:$0xf]
        %v355 = vld [vmem:[%s262 + $0x2c] sm:$0xf]
        %v356 = vld [vmem:[%s262 + $0x30] sm:$0xf]
        %v357 = vld [vmem:[%s262 + $0x34] sm:$0xf]
        %v358 = vld [vmem:[%s262 + $0x38] sm:$0xf]
        %v359 = vld [vmem:[%s262 + $0x3c] sm:$0xf]
        %v360 = vunpack.c.l.bf16 %v344
        %v361 = vunpack.c.l.bf16 %v345
        %v362 = vunpack.c.l.bf16 %v346
        %v363 = vunpack.c.l.bf16 %v347
        %v364 = vunpack.c.l.bf16 %v348
        %v365 = vunpack.c.l.bf16 %v349
        %v366 = vunpack.c.l.bf16 %v350
        %v367 = vunpack.c.l.bf16 %v351
        %v368 = vunpack.c.l.bf16 %v352
        %v369 = vunpack.c.l.bf16 %v353
        %v370 = vunpack.c.l.bf16 %v354
        %v371 = vunpack.c.l.bf16 %v355
        %v372 = vunpack.c.l.bf16 %v356
        %v373 = vunpack.c.l.bf16 %v357
        %v374 = vunpack.c.l.bf16 %v358
        %v375 = vunpack.c.l.bf16 %v359
        %v376 = vpack.c.bf16 %v297, %v296
        %v377 = vpack.c.bf16 %v299, %v298
        %v378 = vpack.c.bf16 %v301, %v300
        %v379 = vpack.c.bf16 %v303, %v302
        %v380 = vpack.c.bf16 %v305, %v304
        %v381 = vpack.c.bf16 %v307, %v306
        %v382 = vpack.c.bf16 %v309, %v308
        %v383 = vpack.c.bf16 %v311, %v310
        %v400 = vunpack.c.l.b16 %v312
        %v401 = vunpack.c.l.b16 %v313
        %v402 = vunpack.c.l.b16 %v314
        %v403 = vunpack.c.l.b16 %v315
        %v404 = vunpack.c.l.b16 %v316
        %v405 = vunpack.c.l.b16 %v317
        %v406 = vunpack.c.l.b16 %v318
        %v407 = vunpack.c.l.b16 %v319
        %v408 = vunpack.c.l.b16 %v320
        %v409 = vunpack.c.l.b16 %v321
        %v410 = vunpack.c.l.b16 %v322
        %v411 = vunpack.c.l.b16 %v323
        %v412 = vunpack.c.l.b16 %v324
        %v413 = vunpack.c.l.b16 %v325
        %v414 = vunpack.c.l.b16 %v326
        %v415 = vunpack.c.l.b16 %v327
        %v416 = vpack.c.b16 %v401, %v400
        %v417 = vpack.c.b16 %v403, %v402
        %v418 = vpack.c.b16 %v405, %v404
        %v419 = vpack.c.b16 %v407, %v406
        %v420 = vpack.c.b16 %v409, %v408
        %v421 = vpack.c.b16 %v411, %v410
        %v422 = vpack.c.b16 %v413, %v412
        %v423 = vpack.c.b16 %v415, %v414
        %432 = vmatpush.bf16.msra.mxu0 %v423
        %433 = vmatpush.bf16.msra.mxu0 %v422
        %434 = vmatpush.bf16.msra.mxu0 %v421
        %435 = vmatpush.bf16.msra.mxu0 %v420
        %436 = vmatpush.bf16.msra.mxu0 %v419
        %437 = vmatpush.bf16.msra.mxu0 %v418
        %438 = vmatpush.bf16.msra.mxu0 %v417
        %439 = vmatpush.bf16.msra.mxu0 %v416
        %440 = vmatmul.bf16.gmra.mxu0 %v376
        %v441 = vpop.f32.mrf.mxu0
        %v442 = vadd.f32 %v360, %v441
        %v443 = vpop.f32.mrf.mxu0
        %v444 = vadd.f32 %v361, %v443
        %445 = vmatmul.bf16.gmra.mxu0 %v377
        %v446 = vpop.f32.mrf.mxu0
        %v447 = vadd.f32 %v362, %v446
        %v448 = vpop.f32.mrf.mxu0
        %v449 = vadd.f32 %v363, %v448
        %450 = vmatmul.bf16.gmra.mxu0 %v378
        %v451 = vpop.f32.mrf.mxu0
        %v452 = vadd.f32 %v364, %v451
        %v453 = vpop.f32.mrf.mxu0
        %v454 = vadd.f32 %v365, %v453
        %455 = vmatmul.bf16.gmra.mxu0 %v379
        %v456 = vpop.f32.mrf.mxu0
        %v457 = vadd.f32 %v366, %v456
        %v458 = vpop.f32.mrf.mxu0
        %v459 = vadd.f32 %v367, %v458
        %460 = vmatmul.bf16.gmra.mxu0 %v380
        %v461 = vpop.f32.mrf.mxu0
        %v462 = vadd.f32 %v368, %v461
        %v463 = vpop.f32.mrf.mxu0
        %v464 = vadd.f32 %v369, %v463
        %465 = vmatmul.bf16.gmra.mxu0 %v381
        %v466 = vpop.f32.mrf.mxu0
        %v467 = vadd.f32 %v370, %v466
        %v468 = vpop.f32.mrf.mxu0
        %v469 = vadd.f32 %v371, %v468
        %470 = vmatmul.bf16.gmra.mxu0 %v382
        %v471 = vpop.f32.mrf.mxu0
        %v472 = vadd.f32 %v372, %v471
        %v473 = vpop.f32.mrf.mxu0
        %v474 = vadd.f32 %v373, %v473
        %475 = vmatmul.bf16.gmra.mxu0 %v383
        %v476 = vpop.f32.mrf.mxu0
        %v477 = vadd.f32 %v374, %v476
        %v478 = vpop.f32.mrf.mxu0
        %v479 = vadd.f32 %v375, %v478
        %480 = vdwg.mxu0
        %481 = vmax.xlane.f32.xlu0 %v442
        %v482 = vpop.xlane.xlu0 %481
        %483 = vmax.xlane.f32.xlu0 %v444
        %v484 = vpop.xlane.xlu0 %483
        %485 = vmax.xlane.f32.xlu0 %v447
        %v486 = vpop.xlane.xlu0 %485
        %487 = vmax.xlane.f32.xlu0 %v449
        %v488 = vpop.xlane.xlu0 %487
        %489 = vmax.xlane.f32.xlu0 %v452
        %v490 = vpop.xlane.xlu0 %489
        %491 = vmax.xlane.f32.xlu0 %v454
        %v492 = vpop.xlane.xlu0 %491
        %493 = vmax.xlane.f32.xlu0 %v457
        %v494 = vpop.xlane.xlu0 %493
        %495 = vmax.xlane.f32.xlu0 %v459
        %v496 = vpop.xlane.xlu0 %495
        %497 = vmax.xlane.f32.xlu0 %v462
        %v498 = vpop.xlane.xlu0 %497
        %499 = vmax.xlane.f32.xlu0 %v464
        %v500 = vpop.xlane.xlu0 %499
        %501 = vmax.xlane.f32.xlu0 %v467
        %v502 = vpop.xlane.xlu0 %501
        %503 = vmax.xlane.f32.xlu0 %v469
        %v504 = vpop.xlane.xlu0 %503
        %505 = vmax.xlane.f32.xlu0 %v472
        %v506 = vpop.xlane.xlu0 %505
        %507 = vmax.xlane.f32.xlu0 %v474
        %v508 = vpop.xlane.xlu0 %507
        %509 = vmax.xlane.f32.xlu0 %v477
        %v510 = vpop.xlane.xlu0 %509
        %511 = vmax.xlane.f32.xlu0 %v479
        %v512 = vpop.xlane.xlu0 %511
        %v513 = vsub.f32 %v442, %v482
        %v514 = vsub.f32 %v444, %v484
        %v515 = vsub.f32 %v447, %v486
        %v516 = vsub.f32 %v449, %v488
        %v517 = vsub.f32 %v452, %v490
        %v518 = vsub.f32 %v454, %v492
        %v519 = vsub.f32 %v457, %v494
        %v520 = vsub.f32 %v459, %v496
        %v521 = vsub.f32 %v462, %v498
        %v522 = vsub.f32 %v464, %v500
        %v523 = vsub.f32 %v467, %v502
        %v524 = vsub.f32 %v469, %v504
        %v525 = vsub.f32 %v472, %v506
        %v526 = vsub.f32 %v474, %v508
        %v527 = vsub.f32 %v477, %v510
        %v528 = vsub.f32 %v479, %v512
        %v529 = vmul.f32 %v513, 1.442695
        %v530 = vpow.pop %v529
        %v531 = vmul.f32 %v514, 1.442695
        %v532 = vpow.pop %v531
        %v533 = vmul.f32 %v515, 1.442695
        %v534 = vpow.pop %v533
        %v535 = vmul.f32 %v516, 1.442695
        %v536 = vpow.pop %v535
        %v537 = vmul.f32 %v517, 1.442695
        %v538 = vpow.pop %v537
        %v539 = vmul.f32 %v518, 1.442695
        %v540 = vpow.pop %v539
        %v541 = vmul.f32 %v519, 1.442695
        %v542 = vpow.pop %v541
        %v543 = vmul.f32 %v520, 1.442695
        %v544 = vpow.pop %v543
        %v545 = vmul.f32 %v521, 1.442695
        %v546 = vpow.pop %v545
        %v547 = vmul.f32 %v522, 1.442695
        %v548 = vpow.pop %v547
        %v549 = vmul.f32 %v523, 1.442695
        %v550 = vpow.pop %v549
        %v551 = vmul.f32 %v524, 1.442695
        %v552 = vpow.pop %v551
        %v553 = vmul.f32 %v525, 1.442695
        %v554 = vpow.pop %v553
        %v555 = vmul.f32 %v526, 1.442695
        %v556 = vpow.pop %v555
        %v557 = vmul.f32 %v527, 1.442695
        %v558 = vpow.pop %v557
        %v559 = vmul.f32 %v528, 1.442695
        %v560 = vpow.pop %v559
        %561 = vadd.xlane.f32.xlu0 %v530
        %v562 = vpop.xlane.xlu0 %561
        %563 = vadd.xlane.f32.xlu0 %v532
        %v564 = vpop.xlane.xlu0 %563
        %565 = vadd.xlane.f32.xlu0 %v534
        %v566 = vpop.xlane.xlu0 %565
        %567 = vadd.xlane.f32.xlu0 %v536
        %v568 = vpop.xlane.xlu0 %567
        %569 = vadd.xlane.f32.xlu0 %v538
        %v570 = vpop.xlane.xlu0 %569
        %571 = vadd.xlane.f32.xlu0 %v540
        %v572 = vpop.xlane.xlu0 %571
        %573 = vadd.xlane.f32.xlu0 %v542
        %v574 = vpop.xlane.xlu0 %573
        %575 = vadd.xlane.f32.xlu0 %v544
        %v576 = vpop.xlane.xlu0 %575
        %577 = vadd.xlane.f32.xlu0 %v546
        %v578 = vpop.xlane.xlu0 %577
        %579 = vadd.xlane.f32.xlu0 %v548
        %v580 = vpop.xlane.xlu0 %579
        %581 = vadd.xlane.f32.xlu0 %v550
        %v582 = vpop.xlane.xlu0 %581
        %583 = vadd.xlane.f32.xlu0 %v552
        %v584 = vpop.xlane.xlu0 %583
        %585 = vadd.xlane.f32.xlu0 %v554
        %v586 = vpop.xlane.xlu0 %585
        %587 = vadd.xlane.f32.xlu0 %v556
        %v588 = vpop.xlane.xlu0 %587
        %589 = vadd.xlane.f32.xlu0 %v558
        %v590 = vpop.xlane.xlu0 %589
        %591 = vadd.xlane.f32.xlu0 %v560
        %v592 = vpop.xlane.xlu0 %591
        %v593 = vpack.c.bf16 %v532, %v530
        %v594 = vpack.c.bf16 %v536, %v534
        %v595 = vpack.c.bf16 %v540, %v538
        %v596 = vpack.c.bf16 %v544, %v542
        %v597 = vpack.c.bf16 %v548, %v546
        %v598 = vpack.c.bf16 %v552, %v550
        %v599 = vpack.c.bf16 %v556, %v554
        %v600 = vpack.c.bf16 %v560, %v558
        %v617 = vunpack.c.l.b16 %v328
        %v618 = vunpack.c.l.b16 %v329
        %v619 = vunpack.c.l.b16 %v330
        %v620 = vunpack.c.l.b16 %v331
        %v621 = vunpack.c.l.b16 %v332
        %v622 = vunpack.c.l.b16 %v333
        %v623 = vunpack.c.l.b16 %v334
        %v624 = vunpack.c.l.b16 %v335
        %v625 = vunpack.c.l.b16 %v336
        %v626 = vunpack.c.l.b16 %v337
        %v627 = vunpack.c.l.b16 %v338
        %v628 = vunpack.c.l.b16 %v339
        %v629 = vunpack.c.l.b16 %v340
        %v630 = vunpack.c.l.b16 %v341
        %v631 = vunpack.c.l.b16 %v342
        %v632 = vunpack.c.l.b16 %v343
        %v633 = vpack.c.b16 %v618, %v617
        %v634 = vpack.c.b16 %v620, %v619
        %v635 = vpack.c.b16 %v622, %v621
        %v636 = vpack.c.b16 %v624, %v623
        %v637 = vpack.c.b16 %v626, %v625
        %v638 = vpack.c.b16 %v628, %v627
        %v639 = vpack.c.b16 %v630, %v629
        %v640 = vpack.c.b16 %v632, %v631
        %649 = vmatpush.bf16.msra.mxu0 %v640
        %650 = vmatpush.bf16.msra.mxu0 %v639
        %651 = vmatpush.bf16.msra.mxu0 %v638
        %652 = vmatpush.bf16.msra.mxu0 %v637
        %653 = vmatpush.bf16.msra.mxu0 %v636
        %654 = vmatpush.bf16.msra.mxu0 %v635
        %655 = vmatpush.bf16.msra.mxu0 %v634
        %656 = vmatpush.bf16.msra.mxu0 %v633
        %657 = vmatmul.bf16.gmra.mxu0 %v593
        %v658 = vpop.f32.mrf.mxu0
        %v659 = vadd.f32 0.0, %v658
        %v660 = vpop.f32.mrf.mxu0
        %v661 = vadd.f32 0.0, %v660
        %662 = vmatmul.bf16.gmra.mxu0 %v594
        %v663 = vpop.f32.mrf.mxu0
        %v664 = vadd.f32 0.0, %v663
        %v665 = vpop.f32.mrf.mxu0
        %v666 = vadd.f32 0.0, %v665
        %667 = vmatmul.bf16.gmra.mxu0 %v595
        %v668 = vpop.f32.mrf.mxu0
        %v669 = vadd.f32 0.0, %v668
        %v670 = vpop.f32.mrf.mxu0
        %v671 = vadd.f32 0.0, %v670
        %672 = vmatmul.bf16.gmra.mxu0 %v596
        %v673 = vpop.f32.mrf.mxu0
        %v674 = vadd.f32 0.0, %v673
        %v675 = vpop.f32.mrf.mxu0
        %v676 = vadd.f32 0.0, %v675
        %677 = vmatmul.bf16.gmra.mxu0 %v597
        %v678 = vpop.f32.mrf.mxu0
        %v679 = vadd.f32 0.0, %v678
        %v680 = vpop.f32.mrf.mxu0
        %v681 = vadd.f32 0.0, %v680
        %682 = vmatmul.bf16.gmra.mxu0 %v598
        %v683 = vpop.f32.mrf.mxu0
        %v684 = vadd.f32 0.0, %v683
        %v685 = vpop.f32.mrf.mxu0
        %v686 = vadd.f32 0.0, %v685
        %687 = vmatmul.bf16.gmra.mxu0 %v599
        %v688 = vpop.f32.mrf.mxu0
        %v689 = vadd.f32 0.0, %v688
        %v690 = vpop.f32.mrf.mxu0
        %v691 = vadd.f32 0.0, %v690
        %692 = vmatmul.bf16.gmra.mxu0 %v600
        %v693 = vpop.f32.mrf.mxu0
        %v694 = vadd.f32 0.0, %v693
        %v695 = vpop.f32.mrf.mxu0
        %v696 = vadd.f32 0.0, %v695
        %697 = vdwg.mxu0
        %v698 = vrcp.pop %v562
        %v699 = vrcp.pop %v564
        %v700 = vrcp.pop %v566
        %v701 = vrcp.pop %v568
        %v702 = vrcp.pop %v570
        %v703 = vrcp.pop %v572
        %v704 = vrcp.pop %v574
        %v705 = vrcp.pop %v576
        %v706 = vrcp.pop %v578
        %v707 = vrcp.pop %v580
        %v708 = vrcp.pop %v582
        %v709 = vrcp.pop %v584
        %v710 = vrcp.pop %v586
        %v711 = vrcp.pop %v588
        %v712 = vrcp.pop %v590
        %v713 = vrcp.pop %v592
        %v714 = vmul.f32 %v659, %v698
        %v715 = vmul.f32 %v661, %v699
        %v716 = vmul.f32 %v664, %v700
        %v717 = vmul.f32 %v666, %v701
        %v718 = vmul.f32 %v669, %v702
        %v719 = vmul.f32 %v671, %v703
        %v720 = vmul.f32 %v674, %v704
        %v721 = vmul.f32 %v676, %v705
        %v722 = vmul.f32 %v679, %v706
        %v723 = vmul.f32 %v681, %v707
        %v724 = vmul.f32 %v684, %v708
        %v725 = vmul.f32 %v686, %v709
        %v726 = vmul.f32 %v689, %v710
        %v727 = vmul.f32 %v691, %v711
        %v728 = vmul.f32 %v694, %v712
        %v729 = vmul.f32 %v696, %v713
        %v730 = vlaneseq
        %v731 = vand.u32 %v730, 127
        %vm732 = vcmp.eq.f32.partialorder %v442, %v482
        %vm733 = vcmp.eq.f32.partialorder %v444, %v484
        %vm734 = vcmp.eq.f32.partialorder %v447, %v486
        %vm735 = vcmp.eq.f32.partialorder %v449, %v488
        %vm736 = vcmp.eq.f32.partialorder %v452, %v490
        %vm737 = vcmp.eq.f32.partialorder %v454, %v492
        %vm738 = vcmp.eq.f32.partialorder %v457, %v494
        %vm739 = vcmp.eq.f32.partialorder %v459, %v496
        %vm740 = vcmp.eq.f32.partialorder %v462, %v498
        %vm741 = vcmp.eq.f32.partialorder %v464, %v500
        %vm742 = vcmp.eq.f32.partialorder %v467, %v502
        %vm743 = vcmp.eq.f32.partialorder %v469, %v504
        %vm744 = vcmp.eq.f32.partialorder %v472, %v506
        %vm745 = vcmp.eq.f32.partialorder %v474, %v508
        %vm746 = vcmp.eq.f32.partialorder %v477, %v510
        %vm747 = vcmp.eq.f32.partialorder %v479, %v512
        %v748 = vsel %vm732, %v731, 128
        %v749 = vsel %vm733, %v731, 128
        %v750 = vsel %vm734, %v731, 128
        %v751 = vsel %vm735, %v731, 128
        %v752 = vsel %vm736, %v731, 128
        %v753 = vsel %vm737, %v731, 128
        %v754 = vsel %vm738, %v731, 128
        %v755 = vsel %vm739, %v731, 128
        %v756 = vsel %vm740, %v731, 128
        %v757 = vsel %vm741, %v731, 128
        %v758 = vsel %vm742, %v731, 128
        %v759 = vsel %vm743, %v731, 128
        %v760 = vsel %vm744, %v731, 128
        %v761 = vsel %vm745, %v731, 128
        %v762 = vsel %vm746, %v731, 128
        %v763 = vsel %vm747, %v731, 128
        %v764 = vand.u32 %v748, 65535
        %v765 = vshra.s32 %v748, 16
        %v766 = vcvt.s32.f32 %v764
        %v767 = vcvt.s32.f32 %v765
        %768 = vmin.xlane.f32.xlu0 %v767
        %v769 = vpop.xlane.xlu0 %768
        %vm770 = vcmp.eq.f32.partialorder %v767, %v769
        %v771 = vsel %vm770, %v766, inf
        %772 = vmin.xlane.f32.xlu0 %v771
        %v773 = vpop.xlane.xlu0 %772
        %v774 = vcvt.f32.s32 %v773
        %v775 = vcvt.f32.s32 %v769
        %v776 = vshll.u32 %v775, 16
        %v777 = vadd.s32 %v776, %v774
        %v778 = vand.u32 %v749, 65535
        %v779 = vshra.s32 %v749, 16
        %v780 = vcvt.s32.f32 %v778
        %v781 = vcvt.s32.f32 %v779
        %782 = vmin.xlane.f32.xlu0 %v781
        %v783 = vpop.xlane.xlu0 %782
        %vm784 = vcmp.eq.f32.partialorder %v781, %v783
        %v785 = vsel %vm784, %v780, inf
        %786 = vmin.xlane.f32.xlu0 %v785
        %v787 = vpop.xlane.xlu0 %786
        %v788 = vcvt.f32.s32 %v787
        %v789 = vcvt.f32.s32 %v783
        %v790 = vshll.u32 %v789, 16
        %v791 = vadd.s32 %v790, %v788
        %v792 = vand.u32 %v750, 65535
        %v793 = vshra.s32 %v750, 16
        %v794 = vcvt.s32.f32 %v792
        %v795 = vcvt.s32.f32 %v793
        %796 = vmin.xlane.f32.xlu0 %v795
        %v797 = vpop.xlane.xlu0 %796
        %vm798 = vcmp.eq.f32.partialorder %v795, %v797
        %v799 = vsel %vm798, %v794, inf
        %800 = vmin.xlane.f32.xlu0 %v799
        %v801 = vpop.xlane.xlu0 %800
        %v802 = vcvt.f32.s32 %v801
        %v803 = vcvt.f32.s32 %v797
        %v804 = vshll.u32 %v803, 16
        %v805 = vadd.s32 %v804, %v802
        %v806 = vand.u32 %v751, 65535
        %v807 = vshra.s32 %v751, 16
        %v808 = vcvt.s32.f32 %v806
        %v809 = vcvt.s32.f32 %v807
        %810 = vmin.xlane.f32.xlu0 %v809
        %v811 = vpop.xlane.xlu0 %810
        %vm812 = vcmp.eq.f32.partialorder %v809, %v811
        %v813 = vsel %vm812, %v808, inf
        %814 = vmin.xlane.f32.xlu0 %v813
        %v815 = vpop.xlane.xlu0 %814
        %v816 = vcvt.f32.s32 %v815
        %v817 = vcvt.f32.s32 %v811
        %v818 = vshll.u32 %v817, 16
        %v819 = vadd.s32 %v818, %v816
        %v820 = vand.u32 %v752, 65535
        %v821 = vshra.s32 %v752, 16
        %v822 = vcvt.s32.f32 %v820
        %v823 = vcvt.s32.f32 %v821
        %824 = vmin.xlane.f32.xlu0 %v823
        %v825 = vpop.xlane.xlu0 %824
        %vm826 = vcmp.eq.f32.partialorder %v823, %v825
        %v827 = vsel %vm826, %v822, inf
        %828 = vmin.xlane.f32.xlu0 %v827
        %v829 = vpop.xlane.xlu0 %828
        %v830 = vcvt.f32.s32 %v829
        %v831 = vcvt.f32.s32 %v825
        %v832 = vshll.u32 %v831, 16
        %v833 = vadd.s32 %v832, %v830
        %v834 = vand.u32 %v753, 65535
        %v835 = vshra.s32 %v753, 16
        %v836 = vcvt.s32.f32 %v834
        %v837 = vcvt.s32.f32 %v835
        %838 = vmin.xlane.f32.xlu0 %v837
        %v839 = vpop.xlane.xlu0 %838
        %vm840 = vcmp.eq.f32.partialorder %v837, %v839
        %v841 = vsel %vm840, %v836, inf
        %842 = vmin.xlane.f32.xlu0 %v841
        %v843 = vpop.xlane.xlu0 %842
        %v844 = vcvt.f32.s32 %v843
        %v845 = vcvt.f32.s32 %v839
        %v846 = vshll.u32 %v845, 16
        %v847 = vadd.s32 %v846, %v844
        %v848 = vand.u32 %v754, 65535
        %v849 = vshra.s32 %v754, 16
        %v850 = vcvt.s32.f32 %v848
        %v851 = vcvt.s32.f32 %v849
        %852 = vmin.xlane.f32.xlu0 %v851
        %v853 = vpop.xlane.xlu0 %852
        %vm854 = vcmp.eq.f32.partialorder %v851, %v853
        %v855 = vsel %vm854, %v850, inf
        %856 = vmin.xlane.f32.xlu0 %v855
        %v857 = vpop.xlane.xlu0 %856
        %v858 = vcvt.f32.s32 %v857
        %v859 = vcvt.f32.s32 %v853
        %v860 = vshll.u32 %v859, 16
        %v861 = vadd.s32 %v860, %v858
        %v862 = vand.u32 %v755, 65535
        %v863 = vshra.s32 %v755, 16
        %v864 = vcvt.s32.f32 %v862
        %v865 = vcvt.s32.f32 %v863
        %866 = vmin.xlane.f32.xlu0 %v865
        %v867 = vpop.xlane.xlu0 %866
        %vm868 = vcmp.eq.f32.partialorder %v865, %v867
        %v869 = vsel %vm868, %v864, inf
        %870 = vmin.xlane.f32.xlu0 %v869
        %v871 = vpop.xlane.xlu0 %870
        %v872 = vcvt.f32.s32 %v871
        %v873 = vcvt.f32.s32 %v867
        %v874 = vshll.u32 %v873, 16
        %v875 = vadd.s32 %v874, %v872
        %v876 = vand.u32 %v756, 65535
        %v877 = vshra.s32 %v756, 16
        %v878 = vcvt.s32.f32 %v876
        %v879 = vcvt.s32.f32 %v877
        %880 = vmin.xlane.f32.xlu0 %v879
        %v881 = vpop.xlane.xlu0 %880
        %vm882 = vcmp.eq.f32.partialorder %v879, %v881
        %v883 = vsel %vm882, %v878, inf
        %884 = vmin.xlane.f32.xlu0 %v883
        %v885 = vpop.xlane.xlu0 %884
        %v886 = vcvt.f32.s32 %v885
        %v887 = vcvt.f32.s32 %v881
        %v888 = vshll.u32 %v887, 16
        %v889 = vadd.s32 %v888, %v886
        %v890 = vand.u32 %v757, 65535
        %v891 = vshra.s32 %v757, 16
        %v892 = vcvt.s32.f32 %v890
        %v893 = vcvt.s32.f32 %v891
        %894 = vmin.xlane.f32.xlu0 %v893
        %v895 = vpop.xlane.xlu0 %894
        %vm896 = vcmp.eq.f32.partialorder %v893, %v895
        %v897 = vsel %vm896, %v892, inf
        %898 = vmin.xlane.f32.xlu0 %v897
        %v899 = vpop.xlane.xlu0 %898
        %v900 = vcvt.f32.s32 %v899
        %v901 = vcvt.f32.s32 %v895
        %v902 = vshll.u32 %v901, 16
        %v903 = vadd.s32 %v902, %v900
        %v904 = vand.u32 %v758, 65535
        %v905 = vshra.s32 %v758, 16
        %v906 = vcvt.s32.f32 %v904
        %v907 = vcvt.s32.f32 %v905
        %908 = vmin.xlane.f32.xlu0 %v907
        %v909 = vpop.xlane.xlu0 %908
        %vm910 = vcmp.eq.f32.partialorder %v907, %v909
        %v911 = vsel %vm910, %v906, inf
        %912 = vmin.xlane.f32.xlu0 %v911
        %v913 = vpop.xlane.xlu0 %912
        %v914 = vcvt.f32.s32 %v913
        %v915 = vcvt.f32.s32 %v909
        %v916 = vshll.u32 %v915, 16
        %v917 = vadd.s32 %v916, %v914
        %v918 = vand.u32 %v759, 65535
        %v919 = vshra.s32 %v759, 16
        %v920 = vcvt.s32.f32 %v918
        %v921 = vcvt.s32.f32 %v919
        %922 = vmin.xlane.f32.xlu0 %v921
        %v923 = vpop.xlane.xlu0 %922
        %vm924 = vcmp.eq.f32.partialorder %v921, %v923
        %v925 = vsel %vm924, %v920, inf
        %926 = vmin.xlane.f32.xlu0 %v925
        %v927 = vpop.xlane.xlu0 %926
        %v928 = vcvt.f32.s32 %v927
        %v929 = vcvt.f32.s32 %v923
        %v930 = vshll.u32 %v929, 16
        %v931 = vadd.s32 %v930, %v928
        %v932 = vand.u32 %v760, 65535
        %v933 = vshra.s32 %v760, 16
        %v934 = vcvt.s32.f32 %v932
        %v935 = vcvt.s32.f32 %v933
        %936 = vmin.xlane.f32.xlu0 %v935
        %v937 = vpop.xlane.xlu0 %936
        %vm938 = vcmp.eq.f32.partialorder %v935, %v937
        %v939 = vsel %vm938, %v934, inf
        %940 = vmin.xlane.f32.xlu0 %v939
        %v941 = vpop.xlane.xlu0 %940
        %v942 = vcvt.f32.s32 %v941
        %v943 = vcvt.f32.s32 %v937
        %v944 = vshll.u32 %v943, 16
        %v945 = vadd.s32 %v944, %v942
        %v946 = vand.u32 %v761, 65535
        %v947 = vshra.s32 %v761, 16
        %v948 = vcvt.s32.f32 %v946
        %v949 = vcvt.s32.f32 %v947
        %950 = vmin.xlane.f32.xlu0 %v949
        %v951 = vpop.xlane.xlu0 %950
        %vm952 = vcmp.eq.f32.partialorder %v949, %v951
        %v953 = vsel %vm952, %v948, inf
        %954 = vmin.xlane.f32.xlu0 %v953
        %v955 = vpop.xlane.xlu0 %954
        %v956 = vcvt.f32.s32 %v955
        %v957 = vcvt.f32.s32 %v951
        %v958 = vshll.u32 %v957, 16
        %v959 = vadd.s32 %v958, %v956
        %v960 = vand.u32 %v762, 65535
        %v961 = vshra.s32 %v762, 16
        %v962 = vcvt.s32.f32 %v960
        %v963 = vcvt.s32.f32 %v961
        %964 = vmin.xlane.f32.xlu0 %v963
        %v965 = vpop.xlane.xlu0 %964
        %vm966 = vcmp.eq.f32.partialorder %v963, %v965
        %v967 = vsel %vm966, %v962, inf
        %968 = vmin.xlane.f32.xlu0 %v967
        %v969 = vpop.xlane.xlu0 %968
        %v970 = vcvt.f32.s32 %v969
        %v971 = vcvt.f32.s32 %v965
        %v972 = vshll.u32 %v971, 16
        %v973 = vadd.s32 %v972, %v970
        %v974 = vand.u32 %v763, 65535
        %v975 = vshra.s32 %v763, 16
        %v976 = vcvt.s32.f32 %v974
        %v977 = vcvt.s32.f32 %v975
        %978 = vmin.xlane.f32.xlu0 %v977
        %v979 = vpop.xlane.xlu0 %978
        %vm980 = vcmp.eq.f32.partialorder %v977, %v979
        %v981 = vsel %vm980, %v976, inf
        %982 = vmin.xlane.f32.xlu0 %v981
        %v983 = vpop.xlane.xlu0 %982
        %v984 = vcvt.f32.s32 %v983
        %v985 = vcvt.f32.s32 %v979
        %v986 = vshll.u32 %v985, 16
        %v987 = vadd.s32 %v986, %v984
        %v988 = vcvt.s32.f32 %v777
        %v989 = vcvt.s32.f32 %v791
        %v990 = vcvt.s32.f32 %v805
        %v991 = vcvt.s32.f32 %v819
        %v992 = vcvt.s32.f32 %v833
        %v993 = vcvt.s32.f32 %v847
        %v994 = vcvt.s32.f32 %v861
        %v995 = vcvt.s32.f32 %v875
        %v996 = vcvt.s32.f32 %v889
        %v997 = vcvt.s32.f32 %v903
        %v998 = vcvt.s32.f32 %v917
        %v999 = vcvt.s32.f32 %v931
        %v1000 = vcvt.s32.f32 %v945
        %v1001 = vcvt.s32.f32 %v959
        %v1002 = vcvt.s32.f32 %v973
        %v1003 = vcvt.s32.f32 %v987
        %v1004 = vsub.f32 %v714, %v296
        %v1005 = vsub.f32 %v715, %v297
        %v1006 = vsub.f32 %v716, %v298
        %v1007 = vsub.f32 %v717, %v299
        %v1008 = vsub.f32 %v718, %v300
        %v1009 = vsub.f32 %v719, %v301
        %v1010 = vsub.f32 %v720, %v302
        %v1011 = vsub.f32 %v721, %v303
        %v1012 = vsub.f32 %v722, %v304
        %v1013 = vsub.f32 %v723, %v305
        %v1014 = vsub.f32 %v724, %v306
        %v1015 = vsub.f32 %v725, %v307
        %v1016 = vsub.f32 %v726, %v308
        %v1017 = vsub.f32 %v727, %v309
        %v1018 = vsub.f32 %v728, %v310
        %v1019 = vsub.f32 %v729, %v311
        %v1020 = vand.u32 2147483647, %v1004
        %v1021 = vand.u32 2147483647, %v1005
        %v1022 = vand.u32 2147483647, %v1006
        %v1023 = vand.u32 2147483647, %v1007
        %v1024 = vand.u32 2147483647, %v1008
        %v1025 = vand.u32 2147483647, %v1009
        %v1026 = vand.u32 2147483647, %v1010
        %v1027 = vand.u32 2147483647, %v1011
        %v1028 = vand.u32 2147483647, %v1012
        %v1029 = vand.u32 2147483647, %v1013
        %v1030 = vand.u32 2147483647, %v1014
        %v1031 = vand.u32 2147483647, %v1015
        %v1032 = vand.u32 2147483647, %v1016
        %v1033 = vand.u32 2147483647, %v1017
        %v1034 = vand.u32 2147483647, %v1018
        %v1035 = vand.u32 2147483647, %v1019
        %1036 = vadd.xlane.f32.xlu0 %v1020
        %v1037 = vpop.xlane.xlu0 %1036
        %1038 = vadd.xlane.f32.xlu0 %v1021
        %v1039 = vpop.xlane.xlu0 %1038
        %1040 = vadd.xlane.f32.xlu0 %v1022
        %v1041 = vpop.xlane.xlu0 %1040
        %1042 = vadd.xlane.f32.xlu0 %v1023
        %v1043 = vpop.xlane.xlu0 %1042
        %1044 = vadd.xlane.f32.xlu0 %v1024
        %v1045 = vpop.xlane.xlu0 %1044
        %1046 = vadd.xlane.f32.xlu0 %v1025
        %v1047 = vpop.xlane.xlu0 %1046
        %1048 = vadd.xlane.f32.xlu0 %v1026
        %v1049 = vpop.xlane.xlu0 %1048
        %1050 = vadd.xlane.f32.xlu0 %v1027
        %v1051 = vpop.xlane.xlu0 %1050
        %1052 = vadd.xlane.f32.xlu0 %v1028
        %v1053 = vpop.xlane.xlu0 %1052
        %1054 = vadd.xlane.f32.xlu0 %v1029
        %v1055 = vpop.xlane.xlu0 %1054
        %1056 = vadd.xlane.f32.xlu0 %v1030
        %v1057 = vpop.xlane.xlu0 %1056
        %1058 = vadd.xlane.f32.xlu0 %v1031
        %v1059 = vpop.xlane.xlu0 %1058
        %1060 = vadd.xlane.f32.xlu0 %v1032
        %v1061 = vpop.xlane.xlu0 %1060
        %1062 = vadd.xlane.f32.xlu0 %v1033
        %v1063 = vpop.xlane.xlu0 %1062
        %1064 = vadd.xlane.f32.xlu0 %v1034
        %v1065 = vpop.xlane.xlu0 %1064
        %1066 = vadd.xlane.f32.xlu0 %v1035
        %v1067 = vpop.xlane.xlu0 %1066
        %vm1068 = vcmp.eq.s32.totalorder %v731, 32
        %v1069 = vsel %vm1068, %v988, %v714
        %v1070 = vsel %vm1068, %v989, %v715
        %v1071 = vsel %vm1068, %v990, %v716
        %v1072 = vsel %vm1068, %v991, %v717
        %v1073 = vsel %vm1068, %v992, %v718
        %v1074 = vsel %vm1068, %v993, %v719
        %v1075 = vsel %vm1068, %v994, %v720
        %v1076 = vsel %vm1068, %v995, %v721
        %v1077 = vsel %vm1068, %v996, %v722
        %v1078 = vsel %vm1068, %v997, %v723
        %v1079 = vsel %vm1068, %v998, %v724
        %v1080 = vsel %vm1068, %v999, %v725
        %v1081 = vsel %vm1068, %v1000, %v726
        %v1082 = vsel %vm1068, %v1001, %v727
        %v1083 = vsel %vm1068, %v1002, %v728
        %v1084 = vsel %vm1068, %v1003, %v729
        %vm1085 = vcmp.eq.s32.totalorder %v731, 33
        %v1086 = vsel %vm1085, %v1037, %v1069
        %v1087 = vsel %vm1085, %v1039, %v1070
        %v1088 = vsel %vm1085, %v1041, %v1071
        %v1089 = vsel %vm1085, %v1043, %v1072
        %v1090 = vsel %vm1085, %v1045, %v1073
        %v1091 = vsel %vm1085, %v1047, %v1074
        %v1092 = vsel %vm1085, %v1049, %v1075
        %v1093 = vsel %vm1085, %v1051, %v1076
        %v1094 = vsel %vm1085, %v1053, %v1077
        %v1095 = vsel %vm1085, %v1055, %v1078
        %v1096 = vsel %vm1085, %v1057, %v1079
        %v1097 = vsel %vm1085, %v1059, %v1080
        %v1098 = vsel %vm1085, %v1061, %v1081
        %v1099 = vsel %vm1085, %v1063, %v1082
        %v1100 = vsel %vm1085, %v1065, %v1083
        %v1101 = vsel %vm1085, %v1067, %v1084
        %1102 = vst [vmem:[%s292] sm:$0xff] %v1086
        %1103 = vst [vmem:[%s292 + $0x8] sm:$0xff] %v1087
        %1104 = vst [vmem:[%s292 + $0x10] sm:$0xff] %v1088
        %1105 = vst [vmem:[%s292 + $0x18] sm:$0xff] %v1089
        %1106 = vst [vmem:[%s292 + $0x20] sm:$0xff] %v1090
        %1107 = vst [vmem:[%s292 + $0x28] sm:$0xff] %v1091
        %1108 = vst [vmem:[%s292 + $0x30] sm:$0xff] %v1092
        %1109 = vst [vmem:[%s292 + $0x38] sm:$0xff] %v1093
        %1110 = vst [vmem:[%s292 + $0x40] sm:$0xff] %v1094
        %1111 = vst [vmem:[%s292 + $0x48] sm:$0xff] %v1095
        %1112 = vst [vmem:[%s292 + $0x50] sm:$0xff] %v1096
        %1113 = vst [vmem:[%s292 + $0x58] sm:$0xff] %v1097
        %1114 = vst [vmem:[%s292 + $0x60] sm:$0xff] %v1098
        %1115 = vst [vmem:[%s292 + $0x68] sm:$0xff] %v1099
        %1116 = vst [vmem:[%s292 + $0x70] sm:$0xff] %v1100
        %1117 = vst [vmem:[%s292 + $0x78] sm:$0xff] %v1101
        %s1118 = sand.u32 %s127, 1
        %s1119 = scalar_lea.sflag [#allocation4], %s1118
        %s1120 = sand.u32 %s127, 1
        %s1121 = smul.addr %s1120, 128
        %s1122 = scalar_lea.vmem [#allocation10], %s1121
        // Predicated region
        $region53: #{tpu_custom_call.1} parent=35 // pred_check
          %p1123 = pneg %p137
        $region54: #{tpu_custom_call.1} parent=35 // pred_check_branch
          %1125 = sbr.rel (%p1123) target = $region56
        $region55: #{tpu_custom_call.1} parent=35 // pred_region
          %s1126 = smul.u32 16, %s25
          %1128 = vsyncadd %s1119, 0
          %s1129 = smul.addr %s1126, 8
          %s1130 = scalar_lea.hbm %s4, %s1129
          %s1131 = sshll.u32 %s1122, 4
          %s1132 = int_to_ptr.vmem [resolvable:$true] %s1131
          %s1133 = sshll.u32 %s1130, 4
          %s1134 = int_to_ptr.hbm [resolvable:$true] %s1133
          %1139 = dma.vmem_to_hbm [thread:$0]  %s1132, 2048, %s1134, %s1119, 128, 128, 8
        $region56: #{tpu_custom_call.1} parent=35 // pred_fallthru
          _
      $region36: #{tpu_custom_call.1} parent=5 // pred_fallthru
        _
      %p1140 = scmp.le.s32.totalorder 2, %s20
      // Predicated region
      $region57: #{tpu_custom_call.1} parent=5 // pred_check
        %p1141 = pneg %p1140
      $region58: #{tpu_custom_call.1} parent=5 // pred_check_branch
        %1143 = sbr.rel (%p1141) target = $region60
      $region59: #{tpu_custom_call.1} parent=5 // pred_region
        %s1144 = ssub.s32 %s20, 2
        // Predicated region
        $region61: #{tpu_custom_call.1} parent=59 // pred_check
          %p1145 = pneg %p143
        $region62: #{tpu_custom_call.1} parent=59 // pred_check_branch
          %1147 = sbr.rel (%p1145) target = $region64
        $region63: #{tpu_custom_call.1} parent=59 // pred_region
          %s1148 = sand.u32 %s128, 1
          %s1149 = scalar_lea.sflag [#allocation4], %s1148
          %s1150 = sand.u32 %s128, 1
          %s1151 = smul.addr %s1150, 128
          %s1152 = scalar_lea.vmem [#allocation10], %s1151
          %1154 = dma.done %s1149, 2048
        $region64: #{tpu_custom_call.1} parent=59 // pred_fallthru
          _
      $region60: #{tpu_custom_call.1} parent=5 // pred_fallthru
        _
    $region6: #{tpu_custom_call.1} parent=1 // loop_footer
      %s24 = sadd.s32 1, %s20
    $region7: #{tpu_custom_call.1} parent=1 // loop_footer_branch
      %19 = sbr.rel target = $region3
    $region8: #{tpu_custom_call.1} parent=1 // loop_exit
      _
    %1155 = vsyncpa [#allocation3], 1
    %s1156 = scalar_lea.sflag [#allocation3], 1
    %1157 = vsyncpa %s1156, 1
    %1158 = vsyncpa [#allocation6], 1
    %1159 = vsyncpa [#allocation9], 1
    %s1160 = scalar_lea.sflag [#allocation9], 1
    %1161 = vsyncpa %s1160, 1
    %1162 = vsyncpa [#allocation4], 1
    %s1163 = scalar_lea.sflag [#allocation4], 1
    %1164 = vsyncpa %s1163, 1

</llo_original>
